<compile_context>
chip_gen: v6e
topology: v6e:2x2x1
jax: 0.10.0
libtpu: 0.0.40
codegen_flags: <defaults>
</compile_context>

<pallas_src>
import functools

import jax
import jax.numpy as jnp
from jax import lax
from jax.experimental import pallas as pl
from jax.experimental.pallas import tpu as pltpu


def _round_up(x, m):
    return (x + m - 1) // m * m


# ----------------------------- Fused Pallas kernel -----------------------------

def _fused_lstm_fc_kernel(x_ref, *refs, num_layers, seq_len, batch, hidden, hidden_p):
    """Fused multi-layer LSTM + final Linear (no bias).

    x_ref : (T*B, D0) time-major flattened input (row t*B + b <-> (t, b)), f32.
    refs  : per layer [w_ih (D_l, 4*Hp) bf16, w_hh (H, 4*Hp) bf16, b (1, 4*Hp) f32] * L,
            then w_fc (H, O) bf16, then out_ref (B, O) f32.
    Gate order along the padded 4*Hp axis is [i, f, o, g]; each gate block is
    Hp lanes wide with real data in lanes [0, H) (lane-aligned slices).
    """
    T, B, H, Hp = seq_len, batch, hidden, hidden_p
    w_refs = refs[:3 * num_layers]
    w_fc_ref = refs[3 * num_layers]
    out_ref = refs[3 * num_layers + 1]

    layer_in = x_ref[...].astype(jnp.bfloat16)                 # (T*B, D0) bf16

    h = None
    for l in range(num_layers):
        w_ih = w_refs[3 * l][...]                               # (D_l, 4Hp) bf16
        w_hh = w_refs[3 * l + 1][...]                           # (H,   4Hp) bf16
        b = w_refs[3 * l + 2][...]                              # (1,   4Hp) f32

        # Hoisted input projection: one big matmul for ALL timesteps (off the
        # serial critical path), bf16 operands, f32 accumulate.
        gx = jnp.dot(layer_in, w_ih,
                     preferred_element_type=jnp.float32) + b    # (T*B, 4Hp) f32

        c = jnp.zeros((B, H), jnp.float32)
        last_layer = (l == num_layers - 1)
        h_steps = []

        # Fully unrolled recurrence: static slices, full scheduling visibility.
        for t in range(T):
            if t == 0:
                # h0 == 0  =>  h @ w_hh == 0 exactly: skip the recurrent matmul.
                gates = gx[:B, :]
            else:
                gates = gx[t * B:(t + 1) * B, :] + jnp.dot(
                    h.astype(jnp.bfloat16), w_hh,
                    preferred_element_type=jnp.float32)         # (B, 4Hp) f32

            # One EUP sigmoid slab over i|f|o (padded lanes are don't-care),
            # one tanh for g.  All slices below start at lane offsets that are
            # multiples of 128 -> no XLU rotates.
            ifo = jax.nn.sigmoid(gates[:, :3 * Hp])             # (B, 3Hp)
            g = jnp.tanh(gates[:, 3 * Hp:3 * Hp + H])           # (B, H)
            i_g = ifo[:, 0:H]
            f_g = ifo[:, Hp:Hp + H]
            o_g = ifo[:, 2 * Hp:2 * Hp + H]

            c = f_g * c + i_g * g
            h = o_g * jnp.tanh(c)

            if not last_layer:
                h_steps.append(h)                               # stays in vregs

        if not last_layer:
            # Next layer's time-major input sequence, assembled in registers
            # (no masked VMEM stores / reload round-trip at these sizes).
            layer_in = jnp.concatenate(h_steps, axis=0).astype(jnp.bfloat16)

    # Final projection on the last timestep (== fc(out[:, -1, :])).
    out_ref[...] = jnp.dot(h.astype(jnp.bfloat16), w_fc_ref[...],
                           preferred_element_type=jnp.float32)


# ----------------------------- Weight prep (one-time) -----------------------------

def _perm_pad_4h(w, H, Hp):
    """Reorder the leading 4H axis [i, f, g, o] -> [i, f, o, g] and pad each
    gate block from H to Hp entries with zeros (lane alignment)."""
    i, f, g, o = w[:H], w[H:2 * H], w[2 * H:3 * H], w[3 * H:4 * H]
    pad_shape = (Hp - H,) + w.shape[1:]
    blocks = []
    for blk in (i, f, o, g):
        blocks.append(blk)
        if Hp > H:
            blocks.append(jnp.zeros(pad_shape, w.dtype))
    return jnp.concatenate(blocks, axis=0)                      # (4*Hp, ...)


def prepare_params(params):
    """One-time weight prep (outside the per-forward path): gate permute+pad,
    transpose, fuse the two biases, cast matmul weights to bf16."""
    prepped_layers = []
    for (w_ih, w_hh, b_ih, b_hh) in params["lstm"]:
        H = w_hh.shape[1]
        Hp = _round_up(H, 128)
        w_ih_p = _perm_pad_4h(jnp.asarray(w_ih, jnp.float32), H, Hp).T  # (D, 4Hp)
        w_hh_p = _perm_pad_4h(jnp.asarray(w_hh, jnp.float32), H, Hp).T  # (H, 4Hp)
        b = _perm_pad_4h(jnp.asarray(b_ih, jnp.float32)
                         + jnp.asarray(b_hh, jnp.float32), H, Hp).reshape(1, 4 * Hp)
        prepped_layers.append((w_ih_p.astype(jnp.bfloat16),
                               w_hh_p.astype(jnp.bfloat16),
                               b))                                       # bias stays f32
    w_fc_t = jnp.asarray(params["fc"], jnp.float32).T.astype(jnp.bfloat16)  # (H, O)
    return {"lstm": prepped_layers, "fc": w_fc_t}


# ----------------------------- Forward wrapper -----------------------------

@jax.jit
def lstm_model_forward(x, prepped):
    """x: (B, T, input_size) batch-first, like the PyTorch module."""
    B, T, D = x.shape
    w_hh0 = prepped["lstm"][0][1]             # (H, 4Hp) bf16
    H = w_hh0.shape[0]
    Hp = w_hh0.shape[1] // 4
    O = prepped["fc"].shape[1]
    L = len(prepped["lstm"])

    # Time-major, flattened: row t*B + b <-> (t, b). Negligible at these sizes;
    # at scale this should be absorbed by a sequential time grid + BlockSpec.
    x_tm = jnp.transpose(x, (1, 0, 2)).reshape(T * B, D).astype(jnp.float32)

    flat_w = [w for layer in prepped["lstm"] for w in layer]
    kernel = functools.partial(_fused_lstm_fc_kernel, num_layers=L,
                               seq_len=T, batch=B, hidden=H, hidden_p=Hp)

    return pl.pallas_call(
        kernel,
        out_shape=jax.ShapeDtypeStruct((B, O), jnp.float32),
        in_specs=[pl.BlockSpec(memory_space=pltpu.MemorySpace.VMEM)]
                 * (1 + len(flat_w) + 1),
        out_specs=pl.BlockSpec(memory_space=pltpu.MemorySpace.VMEM),
    )(x_tm, *flat_w, prepped["fc"])


# ----------------------------- Param init & reference -----------------------------

def init_params(key, input_size, hidden_size, num_layers, output_size):
    """Deterministic uniform(-1/sqrt(H), 1/sqrt(H)) init, like PyTorch's default."""
    bound = 1.0 / jnp.sqrt(hidden_size)
    layers = []
    for layer in range(num_layers):
        d_in = input_size if layer == 0 else hidden_size
        key, k1, k2, k3, k4 = jax.random.split(key, 5)
        w_ih = jax.random.uniform(k1, (4 * hidden_size, d_in), jnp.float32, -bound, bound)
        w_hh = jax.random.uniform(k2, (4 * hidden_size, hidden_size), jnp.float32, -bound, bound)
        b_ih = jax.random.uniform(k3, (4 * hidden_size,), jnp.float32, -bound, bound)
        b_hh = jax.random.uniform(k4, (4 * hidden_size,), jnp.float32, -bound, bound)
        layers.append((w_ih, w_hh, b_ih, b_hh))
    key, kf = jax.random.split(key)
    w_fc = jax.random.uniform(kf, (output_size, hidden_size), jnp.float32, -bound, bound)
    return {"lstm": layers, "fc": w_fc}


def reference_forward(x, params):
    """Pure-JAX f32 reference of the PyTorch semantics (original [i,f,g,o] order)."""
    B = x.shape[0]
    seq = x.astype(jnp.float32)
    for (w_ih, w_hh, b_ih, b_hh) in params["lstm"]:
        H = w_hh.shape[1]
        b = b_ih + b_hh

        def step(carry, x_t):
            h, c = carry
            gates = x_t @ w_ih.T + h @ w_hh.T + b
            i = jax.nn.sigmoid(gates[:, 0 * H:1 * H])
            f = jax.nn.sigmoid(gates[:, 1 * H:2 * H])
            g = jnp.tanh(gates[:, 2 * H:3 * H])
            o = jax.nn.sigmoid(gates[:, 3 * H:4 * H])
            c = f * c + i * g
            h = o * jnp.tanh(c)
            return (h, c), h

        init = (jnp.zeros((B, H), jnp.float32), jnp.zeros((B, H), jnp.float32))
        _, hs = lax.scan(step, init, jnp.transpose(seq, (1, 0, 2)))
        seq = jnp.transpose(hs, (1, 0, 2))
    return seq[:, -1, :] @ params["fc"].T


# ----------------------------- Main -----------------------------

if __name__ == "__main__":
    input_size, hidden_size, num_layers, output_size = 4, 32, 2, 4
    B, T = 2, 8

    key = jax.random.PRNGKey(0)
    key, kx = jax.random.split(key)
    x = jax.random.normal(kx, (B, T, input_size), jnp.float32)
    params = init_params(key, input_size, hidden_size, num_layers, output_size)
    prepped = prepare_params(params)   # one-time weight prep, not per-forward

    out = jax.block_until_ready(lstm_model_forward(x, prepped))
    ref = jax.block_until_ready(reference_forward(x, params))

    assert out.shape == (B, output_size)
    # bf16 matmul operands (f32 accumulation) -> loosened tolerance vs. f32 reference.
    assert jnp.allclose(out, ref, atol=2e-2, rtol=2e-2), "mismatch vs reference"

    print("KERNEL_OK")
</pallas_src>

<mosaic_0001>
module attributes {stable_mosaic.version = 11 : i64} {
  func.func @_fused_lstm_fc_kernel(%arg0: memref<16x4xf32, #tpu.memory_space<vmem>>, %arg1: memref<4x512xbf16, #tpu.memory_space<vmem>>, %arg2: memref<32x512xbf16, #tpu.memory_space<vmem>>, %arg3: memref<1x512xf32, #tpu.memory_space<vmem>>, %arg4: memref<32x512xbf16, #tpu.memory_space<vmem>>, %arg5: memref<32x512xbf16, #tpu.memory_space<vmem>>, %arg6: memref<1x512xf32, #tpu.memory_space<vmem>>, %arg7: memref<32x4xbf16, #tpu.memory_space<vmem>>, %arg8: memref<2x4xf32, #tpu.memory_space<vmem>>) attributes {dimension_semantics = [], scalar_prefetch = 0 : i64, scratch_operands = 0 : i64, tpu.core_type = #tpu.core_type<tc>} {
    %c0 = arith.constant 0 : index
    %c0_0 = arith.constant 0 : index
    %0 = vector.load %arg0[%c0, %c0_0] : memref<16x4xf32, #tpu.memory_space<vmem>>, vector<16x4xf32>
    %1 = arith.truncf %0 : vector<16x4xf32> to vector<16x4xbf16>
    %c0_1 = arith.constant 0 : index
    %c0_2 = arith.constant 0 : index
    %2 = vector.load %arg1[%c0_1, %c0_2] : memref<4x512xbf16, #tpu.memory_space<vmem>>, vector<4x512xbf16>
    %c0_3 = arith.constant 0 : index
    %c0_4 = arith.constant 0 : index
    %3 = vector.load %arg2[%c0_3, %c0_4] : memref<32x512xbf16, #tpu.memory_space<vmem>>, vector<32x512xbf16>
    %c0_5 = arith.constant 0 : index
    %c0_6 = arith.constant 0 : index
    %4 = vector.load %arg3[%c0_5, %c0_6] : memref<1x512xf32, #tpu.memory_space<vmem>>, vector<1x512xf32>
    %cst = arith.constant dense<0.000000e+00> : vector<16x512xf32>
    %5 = tpu.matmul %1, %2, %cst {dimension_numbers = #tpu.dot_dimension_numbers<[1], [0], [0], [1], [0, 0, 1, 1], [], []>} : vector<16x4xbf16>, vector<4x512xbf16>, vector<16x512xf32> -> vector<16x512xf32>
    %6 = vector.broadcast %4 : vector<1x512xf32> to vector<16x512xf32>
    %7 = arith.addf %5, %6 : vector<16x512xf32>
    %cst_7 = arith.constant 0.000000e+00 : f32
    %8 = vector.broadcast %cst_7 : f32 to vector<2x32xf32>
    %9 = vector.extract_strided_slice %7 {offsets = [0, 0], sizes = [2, 512], strides = [1, 1]} : vector<16x512xf32> to vector<2x512xf32>
    %10 = vector.extract_strided_slice %9 {offsets = [0, 0], sizes = [2, 384], strides = [1, 1]} : vector<2x512xf32> to vector<2x384xf32>
    %11 = arith.negf %10 : vector<2x384xf32>
    %12 = math.exp %11 : vector<2x384xf32>
    %cst_8 = arith.constant 1.000000e+00 : f32
    %13 = vector.broadcast %cst_8 : f32 to vector<2x384xf32>
    %14 = arith.addf %13, %12 : vector<2x384xf32>
    %15 = arith.divf %13, %14 : vector<2x384xf32>
    %16 = vector.extract_strided_slice %9 {offsets = [0, 384], sizes = [2, 32], strides = [1, 1]} : vector<2x512xf32> to vector<2x32xf32>
    %17 = math.tanh %16 : vector<2x32xf32>
    %18 = vector.extract_strided_slice %15 {offsets = [0, 0], sizes = [2, 32], strides = [1, 1]} : vector<2x384xf32> to vector<2x32xf32>
    %19 = vector.extract_strided_slice %15 {offsets = [0, 128], sizes = [2, 32], strides = [1, 1]} : vector<2x384xf32> to vector<2x32xf32>
    %20 = vector.extract_strided_slice %15 {offsets = [0, 256], sizes = [2, 32], strides = [1, 1]} : vector<2x384xf32> to vector<2x32xf32>
    %21 = arith.mulf %19, %8 : vector<2x32xf32>
    %22 = arith.mulf %18, %17 : vector<2x32xf32>
    %23 = arith.addf %21, %22 : vector<2x32xf32>
    %24 = math.tanh %23 : vector<2x32xf32>
    %25 = arith.mulf %20, %24 : vector<2x32xf32>
    %26 = vector.extract_strided_slice %7 {offsets = [2, 0], sizes = [2, 512], strides = [1, 1]} : vector<16x512xf32> to vector<2x512xf32>
    %27 = arith.truncf %25 : vector<2x32xf32> to vector<2x32xbf16>
    %cst_9 = arith.constant dense<0.000000e+00> : vector<2x512xf32>
    %28 = tpu.matmul %27, %3, %cst_9 {dimension_numbers = #tpu.dot_dimension_numbers<[1], [0], [0], [1], [0, 0, 1, 1], [], []>} : vector<2x32xbf16>, vector<32x512xbf16>, vector<2x512xf32> -> vector<2x512xf32>
    %29 = arith.addf %26, %28 : vector<2x512xf32>
    %30 = vector.extract_strided_slice %29 {offsets = [0, 0], sizes = [2, 384], strides = [1, 1]} : vector<2x512xf32> to vector<2x384xf32>
    %31 = arith.negf %30 : vector<2x384xf32>
    %32 = math.exp %31 : vector<2x384xf32>
    %cst_10 = arith.constant 1.000000e+00 : f32
    %33 = vector.broadcast %cst_10 : f32 to vector<2x384xf32>
    %34 = arith.addf %33, %32 : vector<2x384xf32>
    %35 = arith.divf %33, %34 : vector<2x384xf32>
    %36 = vector.extract_strided_slice %29 {offsets = [0, 384], sizes = [2, 32], strides = [1, 1]} : vector<2x512xf32> to vector<2x32xf32>
    %37 = math.tanh %36 : vector<2x32xf32>
    %38 = vector.extract_strided_slice %35 {offsets = [0, 0], sizes = [2, 32], strides = [1, 1]} : vector<2x384xf32> to vector<2x32xf32>
    %39 = vector.extract_strided_slice %35 {offsets = [0, 128], sizes = [2, 32], strides = [1, 1]} : vector<2x384xf32> to vector<2x32xf32>
    %40 = vector.extract_strided_slice %35 {offsets = [0, 256], sizes = [2, 32], strides = [1, 1]} : vector<2x384xf32> to vector<2x32xf32>
    %41 = arith.mulf %39, %23 : vector<2x32xf32>
    %42 = arith.mulf %38, %37 : vector<2x32xf32>
    %43 = arith.addf %41, %42 : vector<2x32xf32>
    %44 = math.tanh %43 : vector<2x32xf32>
    %45 = arith.mulf %40, %44 : vector<2x32xf32>
    %46 = vector.extract_strided_slice %7 {offsets = [4, 0], sizes = [2, 512], strides = [1, 1]} : vector<16x512xf32> to vector<2x512xf32>
    %47 = arith.truncf %45 : vector<2x32xf32> to vector<2x32xbf16>
    %cst_11 = arith.constant dense<0.000000e+00> : vector<2x512xf32>
    %48 = tpu.matmul %47, %3, %cst_11 {dimension_numbers = #tpu.dot_dimension_numbers<[1], [0], [0], [1], [0, 0, 1, 1], [], []>} : vector<2x32xbf16>, vector<32x512xbf16>, vector<2x512xf32> -> vector<2x512xf32>
    %49 = arith.addf %46, %48 : vector<2x512xf32>
    %50 = vector.extract_strided_slice %49 {offsets = [0, 0], sizes = [2, 384], strides = [1, 1]} : vector<2x512xf32> to vector<2x384xf32>
    %51 = arith.negf %50 : vector<2x384xf32>
    %52 = math.exp %51 : vector<2x384xf32>
    %cst_12 = arith.constant 1.000000e+00 : f32
    %53 = vector.broadcast %cst_12 : f32 to vector<2x384xf32>
    %54 = arith.addf %53, %52 : vector<2x384xf32>
    %55 = arith.divf %53, %54 : vector<2x384xf32>
    %56 = vector.extract_strided_slice %49 {offsets = [0, 384], sizes = [2, 32], strides = [1, 1]} : vector<2x512xf32> to vector<2x32xf32>
    %57 = math.tanh %56 : vector<2x32xf32>
    %58 = vector.extract_strided_slice %55 {offsets = [0, 0], sizes = [2, 32], strides = [1, 1]} : vector<2x384xf32> to vector<2x32xf32>
    %59 = vector.extract_strided_slice %55 {offsets = [0, 128], sizes = [2, 32], strides = [1, 1]} : vector<2x384xf32> to vector<2x32xf32>
    %60 = vector.extract_strided_slice %55 {offsets = [0, 256], sizes = [2, 32], strides = [1, 1]} : vector<2x384xf32> to vector<2x32xf32>
    %61 = arith.mulf %59, %43 : vector<2x32xf32>
    %62 = arith.mulf %58, %57 : vector<2x32xf32>
    %63 = arith.addf %61, %62 : vector<2x32xf32>
    %64 = math.tanh %63 : vector<2x32xf32>
    %65 = arith.mulf %60, %64 : vector<2x32xf32>
    %66 = vector.extract_strided_slice %7 {offsets = [6, 0], sizes = [2, 512], strides = [1, 1]} : vector<16x512xf32> to vector<2x512xf32>
    %67 = arith.truncf %65 : vector<2x32xf32> to vector<2x32xbf16>
    %cst_13 = arith.constant dense<0.000000e+00> : vector<2x512xf32>
    %68 = tpu.matmul %67, %3, %cst_13 {dimension_numbers = #tpu.dot_dimension_numbers<[1], [0], [0], [1], [0, 0, 1, 1], [], []>} : vector<2x32xbf16>, vector<32x512xbf16>, vector<2x512xf32> -> vector<2x512xf32>
    %69 = arith.addf %66, %68 : vector<2x512xf32>
    %70 = vector.extract_strided_slice %69 {offsets = [0, 0], sizes = [2, 384], strides = [1, 1]} : vector<2x512xf32> to vector<2x384xf32>
    %71 = arith.negf %70 : vector<2x384xf32>
    %72 = math.exp %71 : vector<2x384xf32>
    %cst_14 = arith.constant 1.000000e+00 : f32
    %73 = vector.broadcast %cst_14 : f32 to vector<2x384xf32>
    %74 = arith.addf %73, %72 : vector<2x384xf32>
    %75 = arith.divf %73, %74 : vector<2x384xf32>
    %76 = vector.extract_strided_slice %69 {offsets = [0, 384], sizes = [2, 32], strides = [1, 1]} : vector<2x512xf32> to vector<2x32xf32>
    %77 = math.tanh %76 : vector<2x32xf32>
    %78 = vector.extract_strided_slice %75 {offsets = [0, 0], sizes = [2, 32], strides = [1, 1]} : vector<2x384xf32> to vector<2x32xf32>
    %79 = vector.extract_strided_slice %75 {offsets = [0, 128], sizes = [2, 32], strides = [1, 1]} : vector<2x384xf32> to vector<2x32xf32>
    %80 = vector.extract_strided_slice %75 {offsets = [0, 256], sizes = [2, 32], strides = [1, 1]} : vector<2x384xf32> to vector<2x32xf32>
    %81 = arith.mulf %79, %63 : vector<2x32xf32>
    %82 = arith.mulf %78, %77 : vector<2x32xf32>
    %83 = arith.addf %81, %82 : vector<2x32xf32>
    %84 = math.tanh %83 : vector<2x32xf32>
    %85 = arith.mulf %80, %84 : vector<2x32xf32>
    %86 = vector.extract_strided_slice %7 {offsets = [8, 0], sizes = [2, 512], strides = [1, 1]} : vector<16x512xf32> to vector<2x512xf32>
    %87 = arith.truncf %85 : vector<2x32xf32> to vector<2x32xbf16>
    %cst_15 = arith.constant dense<0.000000e+00> : vector<2x512xf32>
    %88 = tpu.matmul %87, %3, %cst_15 {dimension_numbers = #tpu.dot_dimension_numbers<[1], [0], [0], [1], [0, 0, 1, 1], [], []>} : vector<2x32xbf16>, vector<32x512xbf16>, vector<2x512xf32> -> vector<2x512xf32>
    %89 = arith.addf %86, %88 : vector<2x512xf32>
    %90 = vector.extract_strided_slice %89 {offsets = [0, 0], sizes = [2, 384], strides = [1, 1]} : vector<2x512xf32> to vector<2x384xf32>
    %91 = arith.negf %90 : vector<2x384xf32>
    %92 = math.exp %91 : vector<2x384xf32>
    %cst_16 = arith.constant 1.000000e+00 : f32
    %93 = vector.broadcast %cst_16 : f32 to vector<2x384xf32>
    %94 = arith.addf %93, %92 : vector<2x384xf32>
    %95 = arith.divf %93, %94 : vector<2x384xf32>
    %96 = vector.extract_strided_slice %89 {offsets = [0, 384], sizes = [2, 32], strides = [1, 1]} : vector<2x512xf32> to vector<2x32xf32>
    %97 = math.tanh %96 : vector<2x32xf32>
    %98 = vector.extract_strided_slice %95 {offsets = [0, 0], sizes = [2, 32], strides = [1, 1]} : vector<2x384xf32> to vector<2x32xf32>
    %99 = vector.extract_strided_slice %95 {offsets = [0, 128], sizes = [2, 32], strides = [1, 1]} : vector<2x384xf32> to vector<2x32xf32>
    %100 = vector.extract_strided_slice %95 {offsets = [0, 256], sizes = [2, 32], strides = [1, 1]} : vector<2x384xf32> to vector<2x32xf32>
    %101 = arith.mulf %99, %83 : vector<2x32xf32>
    %102 = arith.mulf %98, %97 : vector<2x32xf32>
    %103 = arith.addf %101, %102 : vector<2x32xf32>
    %104 = math.tanh %103 : vector<2x32xf32>
    %105 = arith.mulf %100, %104 : vector<2x32xf32>
    %106 = vector.extract_strided_slice %7 {offsets = [10, 0], sizes = [2, 512], strides = [1, 1]} : vector<16x512xf32> to vector<2x512xf32>
    %107 = arith.truncf %105 : vector<2x32xf32> to vector<2x32xbf16>
    %cst_17 = arith.constant dense<0.000000e+00> : vector<2x512xf32>
    %108 = tpu.matmul %107, %3, %cst_17 {dimension_numbers = #tpu.dot_dimension_numbers<[1], [0], [0], [1], [0, 0, 1, 1], [], []>} : vector<2x32xbf16>, vector<32x512xbf16>, vector<2x512xf32> -> vector<2x512xf32>
    %109 = arith.addf %106, %108 : vector<2x512xf32>
    %110 = vector.extract_strided_slice %109 {offsets = [0, 0], sizes = [2, 384], strides = [1, 1]} : vector<2x512xf32> to vector<2x384xf32>
    %111 = arith.negf %110 : vector<2x384xf32>
    %112 = math.exp %111 : vector<2x384xf32>
    %cst_18 = arith.constant 1.000000e+00 : f32
    %113 = vector.broadcast %cst_18 : f32 to vector<2x384xf32>
    %114 = arith.addf %113, %112 : vector<2x384xf32>
    %115 = arith.divf %113, %114 : vector<2x384xf32>
    %116 = vector.extract_strided_slice %109 {offsets = [0, 384], sizes = [2, 32], strides = [1, 1]} : vector<2x512xf32> to vector<2x32xf32>
    %117 = math.tanh %116 : vector<2x32xf32>
    %118 = vector.extract_strided_slice %115 {offsets = [0, 0], sizes = [2, 32], strides = [1, 1]} : vector<2x384xf32> to vector<2x32xf32>
    %119 = vector.extract_strided_slice %115 {offsets = [0, 128], sizes = [2, 32], strides = [1, 1]} : vector<2x384xf32> to vector<2x32xf32>
    %120 = vector.extract_strided_slice %115 {offsets = [0, 256], sizes = [2, 32], strides = [1, 1]} : vector<2x384xf32> to vector<2x32xf32>
    %121 = arith.mulf %119, %103 : vector<2x32xf32>
    %122 = arith.mulf %118, %117 : vector<2x32xf32>
    %123 = arith.addf %121, %122 : vector<2x32xf32>
    %124 = math.tanh %123 : vector<2x32xf32>
    %125 = arith.mulf %120, %124 : vector<2x32xf32>
    %126 = vector.extract_strided_slice %7 {offsets = [12, 0], sizes = [2, 512], strides = [1, 1]} : vector<16x512xf32> to vector<2x512xf32>
    %127 = arith.truncf %125 : vector<2x32xf32> to vector<2x32xbf16>
    %cst_19 = arith.constant dense<0.000000e+00> : vector<2x512xf32>
    %128 = tpu.matmul %127, %3, %cst_19 {dimension_numbers = #tpu.dot_dimension_numbers<[1], [0], [0], [1], [0, 0, 1, 1], [], []>} : vector<2x32xbf16>, vector<32x512xbf16>, vector<2x512xf32> -> vector<2x512xf32>
    %129 = arith.addf %126, %128 : vector<2x512xf32>
    %130 = vector.extract_strided_slice %129 {offsets = [0, 0], sizes = [2, 384], strides = [1, 1]} : vector<2x512xf32> to vector<2x384xf32>
    %131 = arith.negf %130 : vector<2x384xf32>
    %132 = math.exp %131 : vector<2x384xf32>
    %cst_20 = arith.constant 1.000000e+00 : f32
    %133 = vector.broadcast %cst_20 : f32 to vector<2x384xf32>
    %134 = arith.addf %133, %132 : vector<2x384xf32>
    %135 = arith.divf %133, %134 : vector<2x384xf32>
    %136 = vector.extract_strided_slice %129 {offsets = [0, 384], sizes = [2, 32], strides = [1, 1]} : vector<2x512xf32> to vector<2x32xf32>
    %137 = math.tanh %136 : vector<2x32xf32>
    %138 = vector.extract_strided_slice %135 {offsets = [0, 0], sizes = [2, 32], strides = [1, 1]} : vector<2x384xf32> to vector<2x32xf32>
    %139 = vector.extract_strided_slice %135 {offsets = [0, 128], sizes = [2, 32], strides = [1, 1]} : vector<2x384xf32> to vector<2x32xf32>
    %140 = vector.extract_strided_slice %135 {offsets = [0, 256], sizes = [2, 32], strides = [1, 1]} : vector<2x384xf32> to vector<2x32xf32>
    %141 = arith.mulf %139, %123 : vector<2x32xf32>
    %142 = arith.mulf %138, %137 : vector<2x32xf32>
    %143 = arith.addf %141, %142 : vector<2x32xf32>
    %144 = math.tanh %143 : vector<2x32xf32>
    %145 = arith.mulf %140, %144 : vector<2x32xf32>
    %146 = vector.extract_strided_slice %7 {offsets = [14, 0], sizes = [2, 512], strides = [1, 1]} : vector<16x512xf32> to vector<2x512xf32>
    %147 = arith.truncf %145 : vector<2x32xf32> to vector<2x32xbf16>
    %cst_21 = arith.constant dense<0.000000e+00> : vector<2x512xf32>
    %148 = tpu.matmul %147, %3, %cst_21 {dimension_numbers = #tpu.dot_dimension_numbers<[1], [0], [0], [1], [0, 0, 1, 1], [], []>} : vector<2x32xbf16>, vector<32x512xbf16>, vector<2x512xf32> -> vector<2x512xf32>
    %149 = arith.addf %146, %148 : vector<2x512xf32>
    %150 = vector.extract_strided_slice %149 {offsets = [0, 0], sizes = [2, 384], strides = [1, 1]} : vector<2x512xf32> to vector<2x384xf32>
    %151 = arith.negf %150 : vector<2x384xf32>
    %152 = math.exp %151 : vector<2x384xf32>
    %cst_22 = arith.constant 1.000000e+00 : f32
    %153 = vector.broadcast %cst_22 : f32 to vector<2x384xf32>
    %154 = arith.addf %153, %152 : vector<2x384xf32>
    %155 = arith.divf %153, %154 : vector<2x384xf32>
    %156 = vector.extract_strided_slice %149 {offsets = [0, 384], sizes = [2, 32], strides = [1, 1]} : vector<2x512xf32> to vector<2x32xf32>
    %157 = math.tanh %156 : vector<2x32xf32>
    %158 = vector.extract_strided_slice %155 {offsets = [0, 0], sizes = [2, 32], strides = [1, 1]} : vector<2x384xf32> to vector<2x32xf32>
    %159 = vector.extract_strided_slice %155 {offsets = [0, 128], sizes = [2, 32], strides = [1, 1]} : vector<2x384xf32> to vector<2x32xf32>
    %160 = vector.extract_strided_slice %155 {offsets = [0, 256], sizes = [2, 32], strides = [1, 1]} : vector<2x384xf32> to vector<2x32xf32>
    %161 = arith.mulf %159, %143 : vector<2x32xf32>
    %162 = arith.mulf %158, %157 : vector<2x32xf32>
    %163 = arith.addf %161, %162 : vector<2x32xf32>
    %164 = math.tanh %163 : vector<2x32xf32>
    %165 = arith.mulf %160, %164 : vector<2x32xf32>
    %166 = tpu.concatenate %25, %45, %65, %85, %105, %125, %145, %165 in 0 : vector<2x32xf32>, vector<2x32xf32>, vector<2x32xf32>, vector<2x32xf32>, vector<2x32xf32>, vector<2x32xf32>, vector<2x32xf32>, vector<2x32xf32> -> vector<16x32xf32>
    %167 = arith.truncf %166 : vector<16x32xf32> to vector<16x32xbf16>
    %c0_23 = arith.constant 0 : index
    %c0_24 = arith.constant 0 : index
    %168 = vector.load %arg4[%c0_23, %c0_24] : memref<32x512xbf16, #tpu.memory_space<vmem>>, vector<32x512xbf16>
    %c0_25 = arith.constant 0 : index
    %c0_26 = arith.constant 0 : index
    %169 = vector.load %arg5[%c0_25, %c0_26] : memref<32x512xbf16, #tpu.memory_space<vmem>>, vector<32x512xbf16>
    %c0_27 = arith.constant 0 : index
    %c0_28 = arith.constant 0 : index
    %170 = vector.load %arg6[%c0_27, %c0_28] : memref<1x512xf32, #tpu.memory_space<vmem>>, vector<1x512xf32>
    %cst_29 = arith.constant dense<0.000000e+00> : vector<16x512xf32>
    %171 = tpu.matmul %167, %168, %cst_29 {dimension_numbers = #tpu.dot_dimension_numbers<[1], [0], [0], [1], [0, 0, 1, 1], [], []>} : vector<16x32xbf16>, vector<32x512xbf16>, vector<16x512xf32> -> vector<16x512xf32>
    %172 = vector.broadcast %170 : vector<1x512xf32> to vector<16x512xf32>
    %173 = arith.addf %171, %172 : vector<16x512xf32>
    %cst_30 = arith.constant 0.000000e+00 : f32
    %174 = vector.broadcast %cst_30 : f32 to vector<2x32xf32>
    %175 = vector.extract_strided_slice %173 {offsets = [0, 0], sizes = [2, 512], strides = [1, 1]} : vector<16x512xf32> to vector<2x512xf32>
    %176 = vector.extract_strided_slice %175 {offsets = [0, 0], sizes = [2, 384], strides = [1, 1]} : vector<2x512xf32> to vector<2x384xf32>
    %177 = arith.negf %176 : vector<2x384xf32>
    %178 = math.exp %177 : vector<2x384xf32>
    %cst_31 = arith.constant 1.000000e+00 : f32
    %179 = vector.broadcast %cst_31 : f32 to vector<2x384xf32>
    %180 = arith.addf %179, %178 : vector<2x384xf32>
    %181 = arith.divf %179, %180 : vector<2x384xf32>
    %182 = vector.extract_strided_slice %175 {offsets = [0, 384], sizes = [2, 32], strides = [1, 1]} : vector<2x512xf32> to vector<2x32xf32>
    %183 = math.tanh %182 : vector<2x32xf32>
    %184 = vector.extract_strided_slice %181 {offsets = [0, 0], sizes = [2, 32], strides = [1, 1]} : vector<2x384xf32> to vector<2x32xf32>
    %185 = vector.extract_strided_slice %181 {offsets = [0, 128], sizes = [2, 32], strides = [1, 1]} : vector<2x384xf32> to vector<2x32xf32>
    %186 = vector.extract_strided_slice %181 {offsets = [0, 256], sizes = [2, 32], strides = [1, 1]} : vector<2x384xf32> to vector<2x32xf32>
    %187 = arith.mulf %185, %174 : vector<2x32xf32>
    %188 = arith.mulf %184, %183 : vector<2x32xf32>
    %189 = arith.addf %187, %188 : vector<2x32xf32>
    %190 = math.tanh %189 : vector<2x32xf32>
    %191 = arith.mulf %186, %190 : vector<2x32xf32>
    %192 = vector.extract_strided_slice %173 {offsets = [2, 0], sizes = [2, 512], strides = [1, 1]} : vector<16x512xf32> to vector<2x512xf32>
    %193 = arith.truncf %191 : vector<2x32xf32> to vector<2x32xbf16>
    %cst_32 = arith.constant dense<0.000000e+00> : vector<2x512xf32>
    %194 = tpu.matmul %193, %169, %cst_32 {dimension_numbers = #tpu.dot_dimension_numbers<[1], [0], [0], [1], [0, 0, 1, 1], [], []>} : vector<2x32xbf16>, vector<32x512xbf16>, vector<2x512xf32> -> vector<2x512xf32>
    %195 = arith.addf %192, %194 : vector<2x512xf32>
    %196 = vector.extract_strided_slice %195 {offsets = [0, 0], sizes = [2, 384], strides = [1, 1]} : vector<2x512xf32> to vector<2x384xf32>
    %197 = arith.negf %196 : vector<2x384xf32>
    %198 = math.exp %197 : vector<2x384xf32>
    %cst_33 = arith.constant 1.000000e+00 : f32
    %199 = vector.broadcast %cst_33 : f32 to vector<2x384xf32>
    %200 = arith.addf %199, %198 : vector<2x384xf32>
    %201 = arith.divf %199, %200 : vector<2x384xf32>
    %202 = vector.extract_strided_slice %195 {offsets = [0, 384], sizes = [2, 32], strides = [1, 1]} : vector<2x512xf32> to vector<2x32xf32>
    %203 = math.tanh %202 : vector<2x32xf32>
    %204 = vector.extract_strided_slice %201 {offsets = [0, 0], sizes = [2, 32], strides = [1, 1]} : vector<2x384xf32> to vector<2x32xf32>
    %205 = vector.extract_strided_slice %201 {offsets = [0, 128], sizes = [2, 32], strides = [1, 1]} : vector<2x384xf32> to vector<2x32xf32>
    %206 = vector.extract_strided_slice %201 {offsets = [0, 256], sizes = [2, 32], strides = [1, 1]} : vector<2x384xf32> to vector<2x32xf32>
    %207 = arith.mulf %205, %189 : vector<2x32xf32>
    %208 = arith.mulf %204, %203 : vector<2x32xf32>
    %209 = arith.addf %207, %208 : vector<2x32xf32>
    %210 = math.tanh %209 : vector<2x32xf32>
    %211 = arith.mulf %206, %210 : vector<2x32xf32>
    %212 = vector.extract_strided_slice %173 {offsets = [4, 0], sizes = [2, 512], strides = [1, 1]} : vector<16x512xf32> to vector<2x512xf32>
    %213 = arith.truncf %211 : vector<2x32xf32> to vector<2x32xbf16>
    %cst_34 = arith.constant dense<0.000000e+00> : vector<2x512xf32>
    %214 = tpu.matmul %213, %169, %cst_34 {dimension_numbers = #tpu.dot_dimension_numbers<[1], [0], [0], [1], [0, 0, 1, 1], [], []>} : vector<2x32xbf16>, vector<32x512xbf16>, vector<2x512xf32> -> vector<2x512xf32>
    %215 = arith.addf %212, %214 : vector<2x512xf32>
    %216 = vector.extract_strided_slice %215 {offsets = [0, 0], sizes = [2, 384], strides = [1, 1]} : vector<2x512xf32> to vector<2x384xf32>
    %217 = arith.negf %216 : vector<2x384xf32>
    %218 = math.exp %217 : vector<2x384xf32>
    %cst_35 = arith.constant 1.000000e+00 : f32
    %219 = vector.broadcast %cst_35 : f32 to vector<2x384xf32>
    %220 = arith.addf %219, %218 : vector<2x384xf32>
    %221 = arith.divf %219, %220 : vector<2x384xf32>
    %222 = vector.extract_strided_slice %215 {offsets = [0, 384], sizes = [2, 32], strides = [1, 1]} : vector<2x512xf32> to vector<2x32xf32>
    %223 = math.tanh %222 : vector<2x32xf32>
    %224 = vector.extract_strided_slice %221 {offsets = [0, 0], sizes = [2, 32], strides = [1, 1]} : vector<2x384xf32> to vector<2x32xf32>
    %225 = vector.extract_strided_slice %221 {offsets = [0, 128], sizes = [2, 32], strides = [1, 1]} : vector<2x384xf32> to vector<2x32xf32>
    %226 = vector.extract_strided_slice %221 {offsets = [0, 256], sizes = [2, 32], strides = [1, 1]} : vector<2x384xf32> to vector<2x32xf32>
    %227 = arith.mulf %225, %209 : vector<2x32xf32>
    %228 = arith.mulf %224, %223 : vector<2x32xf32>
    %229 = arith.addf %227, %228 : vector<2x32xf32>
    %230 = math.tanh %229 : vector<2x32xf32>
    %231 = arith.mulf %226, %230 : vector<2x32xf32>
    %232 = vector.extract_strided_slice %173 {offsets = [6, 0], sizes = [2, 512], strides = [1, 1]} : vector<16x512xf32> to vector<2x512xf32>
    %233 = arith.truncf %231 : vector<2x32xf32> to vector<2x32xbf16>
    %cst_36 = arith.constant dense<0.000000e+00> : vector<2x512xf32>
    %234 = tpu.matmul %233, %169, %cst_36 {dimension_numbers = #tpu.dot_dimension_numbers<[1], [0], [0], [1], [0, 0, 1, 1], [], []>} : vector<2x32xbf16>, vector<32x512xbf16>, vector<2x512xf32> -> vector<2x512xf32>
    %235 = arith.addf %232, %234 : vector<2x512xf32>
    %236 = vector.extract_strided_slice %235 {offsets = [0, 0], sizes = [2, 384], strides = [1, 1]} : vector<2x512xf32> to vector<2x384xf32>
    %237 = arith.negf %236 : vector<2x384xf32>
    %238 = math.exp %237 : vector<2x384xf32>
    %cst_37 = arith.constant 1.000000e+00 : f32
    %239 = vector.broadcast %cst_37 : f32 to vector<2x384xf32>
    %240 = arith.addf %239, %238 : vector<2x384xf32>
    %241 = arith.divf %239, %240 : vector<2x384xf32>
    %242 = vector.extract_strided_slice %235 {offsets = [0, 384], sizes = [2, 32], strides = [1, 1]} : vector<2x512xf32> to vector<2x32xf32>
    %243 = math.tanh %242 : vector<2x32xf32>
    %244 = vector.extract_strided_slice %241 {offsets = [0, 0], sizes = [2, 32], strides = [1, 1]} : vector<2x384xf32> to vector<2x32xf32>
    %245 = vector.extract_strided_slice %241 {offsets = [0, 128], sizes = [2, 32], strides = [1, 1]} : vector<2x384xf32> to vector<2x32xf32>
    %246 = vector.extract_strided_slice %241 {offsets = [0, 256], sizes = [2, 32], strides = [1, 1]} : vector<2x384xf32> to vector<2x32xf32>
    %247 = arith.mulf %245, %229 : vector<2x32xf32>
    %248 = arith.mulf %244, %243 : vector<2x32xf32>
    %249 = arith.addf %247, %248 : vector<2x32xf32>
    %250 = math.tanh %249 : vector<2x32xf32>
    %251 = arith.mulf %246, %250 : vector<2x32xf32>
    %252 = vector.extract_strided_slice %173 {offsets = [8, 0], sizes = [2, 512], strides = [1, 1]} : vector<16x512xf32> to vector<2x512xf32>
    %253 = arith.truncf %251 : vector<2x32xf32> to vector<2x32xbf16>
    %cst_38 = arith.constant dense<0.000000e+00> : vector<2x512xf32>
    %254 = tpu.matmul %253, %169, %cst_38 {dimension_numbers = #tpu.dot_dimension_numbers<[1], [0], [0], [1], [0, 0, 1, 1], [], []>} : vector<2x32xbf16>, vector<32x512xbf16>, vector<2x512xf32> -> vector<2x512xf32>
    %255 = arith.addf %252, %254 : vector<2x512xf32>
    %256 = vector.extract_strided_slice %255 {offsets = [0, 0], sizes = [2, 384], strides = [1, 1]} : vector<2x512xf32> to vector<2x384xf32>
    %257 = arith.negf %256 : vector<2x384xf32>
    %258 = math.exp %257 : vector<2x384xf32>
    %cst_39 = arith.constant 1.000000e+00 : f32
    %259 = vector.broadcast %cst_39 : f32 to vector<2x384xf32>
    %260 = arith.addf %259, %258 : vector<2x384xf32>
    %261 = arith.divf %259, %260 : vector<2x384xf32>
    %262 = vector.extract_strided_slice %255 {offsets = [0, 384], sizes = [2, 32], strides = [1, 1]} : vector<2x512xf32> to vector<2x32xf32>
    %263 = math.tanh %262 : vector<2x32xf32>
    %264 = vector.extract_strided_slice %261 {offsets = [0, 0], sizes = [2, 32], strides = [1, 1]} : vector<2x384xf32> to vector<2x32xf32>
    %265 = vector.extract_strided_slice %261 {offsets = [0, 128], sizes = [2, 32], strides = [1, 1]} : vector<2x384xf32> to vector<2x32xf32>
    %266 = vector.extract_strided_slice %261 {offsets = [0, 256], sizes = [2, 32], strides = [1, 1]} : vector<2x384xf32> to vector<2x32xf32>
    %267 = arith.mulf %265, %249 : vector<2x32xf32>
    %268 = arith.mulf %264, %263 : vector<2x32xf32>
    %269 = arith.addf %267, %268 : vector<2x32xf32>
    %270 = math.tanh %269 : vector<2x32xf32>
    %271 = arith.mulf %266, %270 : vector<2x32xf32>
    %272 = vector.extract_strided_slice %173 {offsets = [10, 0], sizes = [2, 512], strides = [1, 1]} : vector<16x512xf32> to vector<2x512xf32>
    %273 = arith.truncf %271 : vector<2x32xf32> to vector<2x32xbf16>
    %cst_40 = arith.constant dense<0.000000e+00> : vector<2x512xf32>
    %274 = tpu.matmul %273, %169, %cst_40 {dimension_numbers = #tpu.dot_dimension_numbers<[1], [0], [0], [1], [0, 0, 1, 1], [], []>} : vector<2x32xbf16>, vector<32x512xbf16>, vector<2x512xf32> -> vector<2x512xf32>
    %275 = arith.addf %272, %274 : vector<2x512xf32>
    %276 = vector.extract_strided_slice %275 {offsets = [0, 0], sizes = [2, 384], strides = [1, 1]} : vector<2x512xf32> to vector<2x384xf32>
    %277 = arith.negf %276 : vector<2x384xf32>
    %278 = math.exp %277 : vector<2x384xf32>
    %cst_41 = arith.constant 1.000000e+00 : f32
    %279 = vector.broadcast %cst_41 : f32 to vector<2x384xf32>
    %280 = arith.addf %279, %278 : vector<2x384xf32>
    %281 = arith.divf %279, %280 : vector<2x384xf32>
    %282 = vector.extract_strided_slice %275 {offsets = [0, 384], sizes = [2, 32], strides = [1, 1]} : vector<2x512xf32> to vector<2x32xf32>
    %283 = math.tanh %282 : vector<2x32xf32>
    %284 = vector.extract_strided_slice %281 {offsets = [0, 0], sizes = [2, 32], strides = [1, 1]} : vector<2x384xf32> to vector<2x32xf32>
    %285 = vector.extract_strided_slice %281 {offsets = [0, 128], sizes = [2, 32], strides = [1, 1]} : vector<2x384xf32> to vector<2x32xf32>
    %286 = vector.extract_strided_slice %281 {offsets = [0, 256], sizes = [2, 32], strides = [1, 1]} : vector<2x384xf32> to vector<2x32xf32>
    %287 = arith.mulf %285, %269 : vector<2x32xf32>
    %288 = arith.mulf %284, %283 : vector<2x32xf32>
    %289 = arith.addf %287, %288 : vector<2x32xf32>
    %290 = math.tanh %289 : vector<2x32xf32>
    %291 = arith.mulf %286, %290 : vector<2x32xf32>
    %292 = vector.extract_strided_slice %173 {offsets = [12, 0], sizes = [2, 512], strides = [1, 1]} : vector<16x512xf32> to vector<2x512xf32>
    %293 = arith.truncf %291 : vector<2x32xf32> to vector<2x32xbf16>
    %cst_42 = arith.constant dense<0.000000e+00> : vector<2x512xf32>
    %294 = tpu.matmul %293, %169, %cst_42 {dimension_numbers = #tpu.dot_dimension_numbers<[1], [0], [0], [1], [0, 0, 1, 1], [], []>} : vector<2x32xbf16>, vector<32x512xbf16>, vector<2x512xf32> -> vector<2x512xf32>
    %295 = arith.addf %292, %294 : vector<2x512xf32>
    %296 = vector.extract_strided_slice %295 {offsets = [0, 0], sizes = [2, 384], strides = [1, 1]} : vector<2x512xf32> to vector<2x384xf32>
    %297 = arith.negf %296 : vector<2x384xf32>
    %298 = math.exp %297 : vector<2x384xf32>
    %cst_43 = arith.constant 1.000000e+00 : f32
    %299 = vector.broadcast %cst_43 : f32 to vector<2x384xf32>
    %300 = arith.addf %299, %298 : vector<2x384xf32>
    %301 = arith.divf %299, %300 : vector<2x384xf32>
    %302 = vector.extract_strided_slice %295 {offsets = [0, 384], sizes = [2, 32], strides = [1, 1]} : vector<2x512xf32> to vector<2x32xf32>
    %303 = math.tanh %302 : vector<2x32xf32>
    %304 = vector.extract_strided_slice %301 {offsets = [0, 0], sizes = [2, 32], strides = [1, 1]} : vector<2x384xf32> to vector<2x32xf32>
    %305 = vector.extract_strided_slice %301 {offsets = [0, 128], sizes = [2, 32], strides = [1, 1]} : vector<2x384xf32> to vector<2x32xf32>
    %306 = vector.extract_strided_slice %301 {offsets = [0, 256], sizes = [2, 32], strides = [1, 1]} : vector<2x384xf32> to vector<2x32xf32>
    %307 = arith.mulf %305, %289 : vector<2x32xf32>
    %308 = arith.mulf %304, %303 : vector<2x32xf32>
    %309 = arith.addf %307, %308 : vector<2x32xf32>
    %310 = math.tanh %309 : vector<2x32xf32>
    %311 = arith.mulf %306, %310 : vector<2x32xf32>
    %312 = vector.extract_strided_slice %173 {offsets = [14, 0], sizes = [2, 512], strides = [1, 1]} : vector<16x512xf32> to vector<2x512xf32>
    %313 = arith.truncf %311 : vector<2x32xf32> to vector<2x32xbf16>
    %cst_44 = arith.constant dense<0.000000e+00> : vector<2x512xf32>
    %314 = tpu.matmul %313, %169, %cst_44 {dimension_numbers = #tpu.dot_dimension_numbers<[1], [0], [0], [1], [0, 0, 1, 1], [], []>} : vector<2x32xbf16>, vector<32x512xbf16>, vector<2x512xf32> -> vector<2x512xf32>
    %315 = arith.addf %312, %314 : vector<2x512xf32>
    %316 = vector.extract_strided_slice %315 {offsets = [0, 0], sizes = [2, 384], strides = [1, 1]} : vector<2x512xf32> to vector<2x384xf32>
    %317 = arith.negf %316 : vector<2x384xf32>
    %318 = math.exp %317 : vector<2x384xf32>
    %cst_45 = arith.constant 1.000000e+00 : f32
    %319 = vector.broadcast %cst_45 : f32 to vector<2x384xf32>
    %320 = arith.addf %319, %318 : vector<2x384xf32>
    %321 = arith.divf %319, %320 : vector<2x384xf32>
    %322 = vector.extract_strided_slice %315 {offsets = [0, 384], sizes = [2, 32], strides = [1, 1]} : vector<2x512xf32> to vector<2x32xf32>
    %323 = math.tanh %322 : vector<2x32xf32>
    %324 = vector.extract_strided_slice %321 {offsets = [0, 0], sizes = [2, 32], strides = [1, 1]} : vector<2x384xf32> to vector<2x32xf32>
    %325 = vector.extract_strided_slice %321 {offsets = [0, 128], sizes = [2, 32], strides = [1, 1]} : vector<2x384xf32> to vector<2x32xf32>
    %326 = vector.extract_strided_slice %321 {offsets = [0, 256], sizes = [2, 32], strides = [1, 1]} : vector<2x384xf32> to vector<2x32xf32>
    %327 = arith.mulf %325, %309 : vector<2x32xf32>
    %328 = arith.mulf %324, %323 : vector<2x32xf32>
    %329 = arith.addf %327, %328 : vector<2x32xf32>
    %330 = math.tanh %329 : vector<2x32xf32>
    %331 = arith.mulf %326, %330 : vector<2x32xf32>
    %332 = arith.truncf %331 : vector<2x32xf32> to vector<2x32xbf16>
    %c0_46 = arith.constant 0 : index
    %c0_47 = arith.constant 0 : index
    %333 = vector.load %arg7[%c0_46, %c0_47] : memref<32x4xbf16, #tpu.memory_space<vmem>>, vector<32x4xbf16>
    %cst_48 = arith.constant dense<0.000000e+00> : vector<2x4xf32>
    %334 = tpu.matmul %332, %333, %cst_48 {dimension_numbers = #tpu.dot_dimension_numbers<[1], [0], [0], [1], [0, 0, 1, 1], [], []>} : vector<2x32xbf16>, vector<32x4xbf16>, vector<2x4xf32> -> vector<2x4xf32>
    %c0_49 = arith.constant 0 : index
    %c0_50 = arith.constant 0 : index
    %335 = vector.load %arg8[%c0_49, %c0_50] : memref<2x4xf32, #tpu.memory_space<vmem>>, vector<2x4xf32>
    tpu.vector_store %arg8[%c0_49, %c0_50], %334 {strides = array<i32>} : memref<2x4xf32, #tpu.memory_space<vmem>>, vector<2x4xf32>,
    return
  }
}

</mosaic_0001>

<llo_original>
// kernel: lstm_model_forward.1
$region0: #{lstm_model_forward.1}
  #allocation0 [shape = 'u32[]', space=smem, size = 0x4, offset = 0x4, fixed_abs, tag = 'smem constant byte address 0x4 - core index']
  #allocation1 [shape = 'u32[144,128]{1,0:T(1,128)}', space=vmem, size = 0x12000, scoped, tag = 'internal scratch']
  %s0 = inlined_call_operand.vmem [shape: f32[16,4], index: 0, kind: input, shape index: {}]
  %s1 = inlined_call_operand.vmem [shape: bf16[4,512], index: 1, kind: input, shape index: {}]
  %s2 = inlined_call_operand.hbm [shape: bf16[32,512], index: 2, kind: input, shape index: {}]
  %s3 = inlined_call_operand.vmem [shape: f32[1,512], index: 3, kind: input, shape index: {}]
  %s4 = inlined_call_operand.hbm [shape: bf16[32,512], index: 4, kind: input, shape index: {}]
  %s5 = inlined_call_operand.hbm [shape: bf16[32,512], index: 5, kind: input, shape index: {}]
  %s6 = inlined_call_operand.vmem [shape: f32[1,512], index: 6, kind: input, shape index: {}]
  %s7 = inlined_call_operand.vmem [shape: bf16[32,4], index: 7, kind: input, shape index: {}]
  %s8 = inlined_call_operand.hbm [shape: f32[2,4], index: 8, kind: output, shape index: {}]
  %s9 = sld [smem:[#allocation0]]
  $region54: #{lstm_model_forward.1} parent=0
    _
  %s11 = ssub.s32 1, %s9
  %s12 = scalar_select 0, %s11, %s9
  $region1: #{lstm_model_forward.1} parent=0
    #allocation2 [shape = 'u8[32768]{0}', space=vmem, size = 0x8000, scoped, tag = 'input window, operand 2, single buffered']
    #allocation3 [shape = 's32[1]{0}', space=sflag, size = 0x4, scoped, tag = 'scoped memory for lstm_model_forward.1']
    #allocation4 [shape = 's32[1]{0}', space=sflag, size = 0x4, scoped, tag = 'scoped memory for lstm_model_forward.1']
    #allocation5 [shape = 'u8[32768]{0}', space=vmem, size = 0x8000, scoped, tag = 'input window, operand 4, single buffered']
    #allocation6 [shape = 's32[1]{0}', space=sflag, size = 0x4, scoped, tag = 'scoped memory for lstm_model_forward.1']
    #allocation7 [shape = 'u8[32768]{0}', space=vmem, size = 0x8000, scoped, tag = 'input window, operand 5, single buffered']
    #allocation8 [shape = 'u8[1024]{0}', space=vmem, size = 0x400, scoped, tag = 'output window, operand 0, single buffered']
    %13 = vsyncpa [#allocation3], 0
    %14 = vsyncpa [#allocation6], 0
    %15 = vsyncpa [#allocation4], 0
    // Predicated region
    $region2: #{lstm_model_forward.1} parent=1 // pred_check
      _
    $region3: #{lstm_model_forward.1} parent=1 // pred_check_branch
      %17 = sbr.rel (0) target = $region5
    $region4: #{lstm_model_forward.1} parent=1 // pred_region
      _
    $region5: #{lstm_model_forward.1} parent=1 // pred_fallthru
      _
    // Predicated region
    $region6: #{lstm_model_forward.1} parent=1 // pred_check
      _
    $region7: #{lstm_model_forward.1} parent=1 // pred_check_branch
      %19 = sbr.rel (0) target = $region9
    $region8: #{lstm_model_forward.1} parent=1 // pred_region
      _
    $region9: #{lstm_model_forward.1} parent=1 // pred_fallthru
      _
    // Predicated region
    $region10: #{lstm_model_forward.1} parent=1 // pred_check
      _
    $region11: #{lstm_model_forward.1} parent=1 // pred_check_branch
      %21 = sbr.rel (0) target = $region13
    $region12: #{lstm_model_forward.1} parent=1 // pred_region
      %s23 = ssub.s32 1024, 1024
      %24 = vsyncadd [#allocation3], %s23
      %s25 = sshll.u32 [#allocation2], 4
      %s26 = int_to_ptr.vmem [resolvable:$true] %s25
      %31 = dma.hbm_to_vmem [thread:$0]  %s2, 1024, %s26, [#allocation3], 256, 256, 16
    $region13: #{lstm_model_forward.1} parent=1 // pred_fallthru
      _
    // Predicated region
    $region14: #{lstm_model_forward.1} parent=1 // pred_check
      _
    $region15: #{lstm_model_forward.1} parent=1 // pred_check_branch
      %33 = sbr.rel (0) target = $region17
    $region16: #{lstm_model_forward.1} parent=1 // pred_region
      _
    $region17: #{lstm_model_forward.1} parent=1 // pred_fallthru
      _
    // Predicated region
    $region18: #{lstm_model_forward.1} parent=1 // pred_check
      _
    $region19: #{lstm_model_forward.1} parent=1 // pred_check_branch
      %35 = sbr.rel (0) target = $region21
    $region20: #{lstm_model_forward.1} parent=1 // pred_region
      %s37 = ssub.s32 1024, 1024
      %38 = vsyncadd [#allocation6], %s37
      %s39 = sshll.u32 [#allocation5], 4
      %s40 = int_to_ptr.vmem [resolvable:$true] %s39
      %45 = dma.hbm_to_vmem [thread:$0]  %s4, 1024, %s40, [#allocation6], 256, 256, 16
    $region21: #{lstm_model_forward.1} parent=1 // pred_fallthru
      _
    // Predicated region
    $region22: #{lstm_model_forward.1} parent=1 // pred_check
      _
    $region23: #{lstm_model_forward.1} parent=1 // pred_check_branch
      %47 = sbr.rel (0) target = $region25
    $region24: #{lstm_model_forward.1} parent=1 // pred_region
      %s49 = ssub.s32 1024, 1024
      %50 = vsyncadd [#allocation6], %s49
      %s51 = sshll.u32 [#allocation7], 4
      %s52 = int_to_ptr.vmem [resolvable:$true] %s51
      %57 = dma.hbm_to_vmem [thread:$0]  %s5, 1024, %s52, [#allocation6], 256, 256, 16
    $region25: #{lstm_model_forward.1} parent=1 // pred_fallthru
      _
    // Predicated region
    $region26: #{lstm_model_forward.1} parent=1 // pred_check
      _
    $region27: #{lstm_model_forward.1} parent=1 // pred_check_branch
      %59 = sbr.rel (0) target = $region29
    $region28: #{lstm_model_forward.1} parent=1 // pred_region
      _
    $region29: #{lstm_model_forward.1} parent=1 // pred_fallthru
      _
    // Predicated region
    $region30: #{lstm_model_forward.1} parent=1 // pred_check
      _
    $region31: #{lstm_model_forward.1} parent=1 // pred_check_branch
      %61 = sbr.rel (0) target = $region33
    $region32: #{lstm_model_forward.1} parent=1 // pred_region
      _
    $region33: #{lstm_model_forward.1} parent=1 // pred_fallthru
      _
    // Predicated region
    $region34: #{lstm_model_forward.1} parent=1 // pred_check
      _
    $region35: #{lstm_model_forward.1} parent=1 // pred_check_branch
      %63 = sbr.rel (0) target = $region37
    $region36: #{lstm_model_forward.1} parent=1 // pred_region
      %64 = dma.done [#allocation3], 1024
    $region37: #{lstm_model_forward.1} parent=1 // pred_fallthru
      _
    // Predicated region
    $region38: #{lstm_model_forward.1} parent=1 // pred_check
      _
    $region39: #{lstm_model_forward.1} parent=1 // pred_check_branch
      %66 = sbr.rel (0) target = $region41
    $region40: #{lstm_model_forward.1} parent=1 // pred_region
      %67 = dma.done [#allocation6], 1024
    $region41: #{lstm_model_forward.1} parent=1 // pred_fallthru
      _
    // Predicated region
    $region42: #{lstm_model_forward.1} parent=1 // pred_check
      _
    $region43: #{lstm_model_forward.1} parent=1 // pred_check_branch
      %69 = sbr.rel (0) target = $region45
    $region44: #{lstm_model_forward.1} parent=1 // pred_region
      %70 = dma.done [#allocation6], 1024
    $region45: #{lstm_model_forward.1} parent=1 // pred_fallthru
      _
    %v72 = vld [vmem:[%s0] sm:$0xff]
    %v73 = vld [vmem:[%s0 + $0x8] sm:$0xff]
    %v74 = vpack.c.bf16 %v73, %v72
    %v75 = vld [vmem:[%s1] sm:$0xff]
    %v76 = vld [vmem:[#allocation2] sm:$0xff]
    %v77 = vld [vmem:[#allocation2 + $0x8] sm:$0xff]
    %v78 = vld [vmem:[#allocation2 + $0x10] sm:$0xff]
    %v79 = vld [vmem:[#allocation2 + $0x18] sm:$0xff]
    %v80 = vld [vmem:[#allocation2 + $0x20] sm:$0xff]
    %v81 = vld [vmem:[#allocation2 + $0x28] sm:$0xff]
    %v82 = vld [vmem:[#allocation2 + $0x30] sm:$0xff]
    %v83 = vld [vmem:[#allocation2 + $0x38] sm:$0xff]
    %v84 = vld [vmem:[%s3] sm:$0xf]
    %v86 = vlaneseq
    %v87 = vshrl.u32 %v86, 7
    %v88 = vsub.s32 0, %v87
    %v89 = vrot.slane %v84, %v88
    %v90 = vlaneseq
    %v91 = vshrl.u32 %v90, 7
    %v92 = vsub.s32 1, %v91
    %v93 = vrot.slane %v84, %v92
    %v94 = vlaneseq
    %v95 = vshrl.u32 %v94, 7
    %v96 = vsub.s32 2, %v95
    %v97 = vrot.slane %v84, %v96
    %v98 = vlaneseq
    %v99 = vshrl.u32 %v98, 7
    %v100 = vsub.s32 3, %v99
    %v101 = vrot.slane %v84, %v100
    %v107 = vcombine.high %v75, %v75
    %v109 = vunpack.c.l.s4 1983009808
    %v110 = vunpack.c.0.s8 %v109
    %v111 = vlaneseq
    %v112 = vshrl.u32 %v111, 7
    %v113 = vsub.s32 %v110, %v112
    %v114 = vrot.slane %v75, %v113
    %v116 = vunpack.c.l.s4 1983009808
    %v117 = vunpack.c.0.s8 %v116
    %v118 = vlaneseq
    %v119 = vshrl.u32 %v118, 7
    %v120 = vsub.s32 %v117, %v119
    %v121 = vrot.slane %v107, %v120
    %v122 = vcombine.high %v114, %v114
    %v123 = vcombine.high %v121, %v121
    %vm124 = vcmask 31744
    %v126 = vsel %vm124, %v74, 0
    %vm128 = vcmask 1041408
    %v130 = vsel %vm128, %v114, 0
    %v133 = vsel %vm128, %v122, 0
    %v136 = vsel %vm128, %v121, 0
    %v139 = vsel %vm128, %v123, 0
    %141 = vmatprep.subr.bf16.mxu0 0
    %142 = vmatpush1.bf16.msra.mxu0 0
    %143 = vmatprep.subr.bf16.mxu0 0
    %144 = vmatpush1.bf16.msra.mxu0 0
    %145 = vmatprep.subr.bf16.mxu0 0
    %146 = vmatpush1.bf16.msra.mxu0 0
    %147 = vmatprep.subr.bf16.mxu0 0
    %148 = vmatpush1.bf16.msra.mxu0 0
    %149 = vmatprep.subr.bf16.mxu0 0
    %150 = vmatpush1.bf16.msra.mxu0 0
    %151 = vmatprep.subr.bf16.mxu0 0
    %152 = vmatpush1.bf16.msra.mxu0 0
    %153 = vmatprep.subr.bf16.mxu0 0
    %154 = vmatpush1.bf16.msra.mxu0 0
    %155 = vmatprep.subr.bf16.mxu0 %v133
    %156 = vmatpush1.bf16.msra.mxu0 %v130
    %157 = vmatprep.subr.bf16.mxu0 0
    %158 = vmatpush2.bf16.msra.mxu0 0
    %159 = vmatprep.subr.bf16.mxu0 0
    %160 = vmatpush2.bf16.msra.mxu0 0
    %161 = vmatprep.subr.bf16.mxu0 0
    %162 = vmatpush2.bf16.msra.mxu0 0
    %163 = vmatprep.subr.bf16.mxu0 0
    %164 = vmatpush2.bf16.msra.mxu0 0
    %165 = vmatprep.subr.bf16.mxu0 0
    %166 = vmatpush2.bf16.msra.mxu0 0
    %167 = vmatprep.subr.bf16.mxu0 0
    %168 = vmatpush2.bf16.msra.mxu0 0
    %169 = vmatprep.subr.bf16.mxu0 0
    %170 = vmatpush2.bf16.msra.mxu0 0
    %171 = vmatprep.subr.bf16.mxu0 0
    %172 = vmatpush2.bf16.msra.mxu0 0
    %173 = vmatprep.mubr.bf16.mxu0 0
    %174 = vmatmul.mubr.bf16.gmra.mxu0 %v126
    %v175 = vpop.f32.mrf.mxu0
    %v176 = vadd.f32 %v89, %v175
    %v177 = vpop.f32.mrf.mxu0
    %v178 = vadd.f32 %v93, %v177
    %v179 = vpop.f32.mrf.mxu0
    %v180 = vadd.f32 %v89, %v179
    %v181 = vpop.f32.mrf.mxu0
    %v182 = vadd.f32 %v93, %v181
    %183 = vdwg.mxu0
    %184 = vmatprep.subr.bf16.mxu0 0
    %185 = vmatpush1.bf16.msra.mxu0 0
    %186 = vmatprep.subr.bf16.mxu0 0
    %187 = vmatpush1.bf16.msra.mxu0 0
    %188 = vmatprep.subr.bf16.mxu0 0
    %189 = vmatpush1.bf16.msra.mxu0 0
    %190 = vmatprep.subr.bf16.mxu0 0
    %191 = vmatpush1.bf16.msra.mxu0 0
    %192 = vmatprep.subr.bf16.mxu0 0
    %193 = vmatpush1.bf16.msra.mxu0 0
    %194 = vmatprep.subr.bf16.mxu0 0
    %195 = vmatpush1.bf16.msra.mxu0 0
    %196 = vmatprep.subr.bf16.mxu0 0
    %197 = vmatpush1.bf16.msra.mxu0 0
    %198 = vmatprep.subr.bf16.mxu0 %v139
    %199 = vmatpush1.bf16.msra.mxu0 %v136
    %200 = vmatprep.subr.bf16.mxu0 0
    %201 = vmatpush2.bf16.msra.mxu0 0
    %202 = vmatprep.subr.bf16.mxu0 0
    %203 = vmatpush2.bf16.msra.mxu0 0
    %204 = vmatprep.subr.bf16.mxu0 0
    %205 = vmatpush2.bf16.msra.mxu0 0
    %206 = vmatprep.subr.bf16.mxu0 0
    %207 = vmatpush2.bf16.msra.mxu0 0
    %208 = vmatprep.subr.bf16.mxu0 0
    %209 = vmatpush2.bf16.msra.mxu0 0
    %210 = vmatprep.subr.bf16.mxu0 0
    %211 = vmatpush2.bf16.msra.mxu0 0
    %212 = vmatprep.subr.bf16.mxu0 0
    %213 = vmatpush2.bf16.msra.mxu0 0
    %214 = vmatprep.subr.bf16.mxu0 0
    %215 = vmatpush2.bf16.msra.mxu0 0
    %216 = vmatprep.mubr.bf16.mxu0 0
    %217 = vmatmul.mubr.bf16.gmra.mxu0 %v126
    %v218 = vpop.f32.mrf.mxu0
    %v219 = vadd.f32 %v97, %v218
    %v220 = vpop.f32.mrf.mxu0
    %v221 = vadd.f32 %v101, %v220
    %v222 = vpop.f32.mrf.mxu0
    %v223 = vadd.f32 %v97, %v222
    %v224 = vpop.f32.mrf.mxu0
    %v225 = vadd.f32 %v101, %v224
    %226 = vdwg.mxu0
    %v227 = vxor.u32 %v176, 2147483648
    %v228 = vxor.u32 %v178, 2147483648
    %v229 = vxor.u32 %v219, 2147483648
    %v230 = vmul.f32 %v227, 1.442695
    %v231 = vpow.pop %v230
    %v232 = vmul.f32 %v228, 1.442695
    %v233 = vpow.pop %v232
    %v234 = vmul.f32 %v229, 1.442695
    %v235 = vpow.pop %v234
    %v236 = vadd.f32 %v231, 1.0
    %v237 = vadd.f32 %v233, 1.0
    %v238 = vadd.f32 %v235, 1.0
    %v239 = vrcp.pop %v236
    %v240 = vmul.f32 1.0, %v239
    %v241 = vrcp.pop %v237
    %v242 = vmul.f32 1.0, %v241
    %v243 = vrcp.pop %v238
    %v244 = vmul.f32 1.0, %v243
    %v245 = vtanh.pop %v221
    %v246 = vmul.f32 %v242, 0.0
    %v247 = vmul.f32 %v240, %v245
    %v248 = vadd.f32 %v246, %v247
    %v249 = vtanh.pop %v248
    %v250 = vmul.f32 %v244, %v249
    %v251 = vpack.c.bf16 %v250, %v250
    %v260 = vunpack.c.l.b16 %v76
    %v261 = vunpack.c.h.b16 %v76
    %v262 = vunpack.c.l.b16 %v77
    %v263 = vunpack.c.h.b16 %v77
    %v264 = vunpack.c.l.b16 %v78
    %v265 = vunpack.c.h.b16 %v78
    %v266 = vunpack.c.l.b16 %v79
    %v267 = vunpack.c.h.b16 %v79
    %v268 = vunpack.c.l.b16 %v80
    %v269 = vunpack.c.h.b16 %v80
    %v270 = vunpack.c.l.b16 %v81
    %v271 = vunpack.c.h.b16 %v81
    %v272 = vunpack.c.l.b16 %v82
    %v273 = vunpack.c.h.b16 %v82
    %v274 = vunpack.c.l.b16 %v83
    %v275 = vunpack.c.h.b16 %v83
    %v276 = vpack.c.b16 %v264, %v260
    %v277 = vpack.c.b16 %v265, %v261
    %v278 = vpack.c.b16 %v266, %v262
    %v279 = vpack.c.b16 %v267, %v263
    %v280 = vpack.c.b16 %v272, %v268
    %v281 = vpack.c.b16 %v273, %v269
    %v282 = vpack.c.b16 %v274, %v270
    %v283 = vpack.c.b16 %v275, %v271
    %vm292 = vcmask 261120
    %v294 = vsel %vm292, %v251, 0
    %296 = vmatprep.subr.bf16.mxu0 0
    %297 = vmatpush1.bf16.msra.mxu0 0
    %298 = vmatprep.subr.bf16.mxu0 0
    %299 = vmatpush1.bf16.msra.mxu0 0
    %300 = vmatprep.subr.bf16.mxu0 0
    %301 = vmatpush1.bf16.msra.mxu0 0
    %302 = vmatprep.subr.bf16.mxu0 0
    %303 = vmatpush1.bf16.msra.mxu0 0
    %304 = vmatprep.subr.bf16.mxu0 0
    %305 = vmatpush1.bf16.msra.mxu0 0
    %306 = vmatprep.subr.bf16.mxu0 0
    %307 = vmatpush1.bf16.msra.mxu0 0
    %308 = vmatprep.subr.bf16.mxu0 %v281
    %309 = vmatpush1.bf16.msra.mxu0 %v280
    %310 = vmatprep.subr.bf16.mxu0 %v277
    %311 = vmatpush1.bf16.msra.mxu0 %v276
    %312 = vmatprep.subr.bf16.mxu0 0
    %313 = vmatpush2.bf16.msra.mxu0 0
    %314 = vmatprep.subr.bf16.mxu0 0
    %315 = vmatpush2.bf16.msra.mxu0 0
    %316 = vmatprep.subr.bf16.mxu0 0
    %317 = vmatpush2.bf16.msra.mxu0 0
    %318 = vmatprep.subr.bf16.mxu0 0
    %319 = vmatpush2.bf16.msra.mxu0 0
    %320 = vmatprep.subr.bf16.mxu0 0
    %321 = vmatpush2.bf16.msra.mxu0 0
    %322 = vmatprep.subr.bf16.mxu0 0
    %323 = vmatpush2.bf16.msra.mxu0 0
    %324 = vmatprep.subr.bf16.mxu0 0
    %325 = vmatpush2.bf16.msra.mxu0 0
    %326 = vmatprep.subr.bf16.mxu0 0
    %327 = vmatpush2.bf16.msra.mxu0 0
    %328 = vmatprep.mubr.bf16.mxu0 0
    %329 = vmatmul.mubr.bf16.gmra.mxu0 %v294
    %v330 = vpop.f32.mrf.mxu0
    %v331 = vadd.f32 0.0, %v330
    %v332 = vpop.f32.mrf.mxu0
    %v333 = vadd.f32 0.0, %v332
    %v334 = vpop.f32.mrf.mxu0
    %v335 = vpop.f32.mrf.mxu0
    %336 = vdwg.mxu0
    %337 = vmatprep.subr.bf16.mxu0 0
    %338 = vmatpush1.bf16.msra.mxu0 0
    %339 = vmatprep.subr.bf16.mxu0 0
    %340 = vmatpush1.bf16.msra.mxu0 0
    %341 = vmatprep.subr.bf16.mxu0 0
    %342 = vmatpush1.bf16.msra.mxu0 0
    %343 = vmatprep.subr.bf16.mxu0 0
    %344 = vmatpush1.bf16.msra.mxu0 0
    %345 = vmatprep.subr.bf16.mxu0 0
    %346 = vmatpush1.bf16.msra.mxu0 0
    %347 = vmatprep.subr.bf16.mxu0 0
    %348 = vmatpush1.bf16.msra.mxu0 0
    %349 = vmatprep.subr.bf16.mxu0 %v283
    %350 = vmatpush1.bf16.msra.mxu0 %v282
    %351 = vmatprep.subr.bf16.mxu0 %v279
    %352 = vmatpush1.bf16.msra.mxu0 %v278
    %353 = vmatprep.subr.bf16.mxu0 0
    %354 = vmatpush2.bf16.msra.mxu0 0
    %355 = vmatprep.subr.bf16.mxu0 0
    %356 = vmatpush2.bf16.msra.mxu0 0
    %357 = vmatprep.subr.bf16.mxu0 0
    %358 = vmatpush2.bf16.msra.mxu0 0
    %359 = vmatprep.subr.bf16.mxu0 0
    %360 = vmatpush2.bf16.msra.mxu0 0
    %361 = vmatprep.subr.bf16.mxu0 0
    %362 = vmatpush2.bf16.msra.mxu0 0
    %363 = vmatprep.subr.bf16.mxu0 0
    %364 = vmatpush2.bf16.msra.mxu0 0
    %365 = vmatprep.subr.bf16.mxu0 0
    %366 = vmatpush2.bf16.msra.mxu0 0
    %367 = vmatprep.subr.bf16.mxu0 0
    %368 = vmatpush2.bf16.msra.mxu0 0
    %369 = vmatprep.mubr.bf16.mxu0 0
    %370 = vmatmul.mubr.bf16.gmra.mxu0 %v294
    %v371 = vpop.f32.mrf.mxu0
    %v372 = vadd.f32 0.0, %v371
    %v373 = vpop.f32.mrf.mxu0
    %v374 = vadd.f32 0.0, %v373
    %v375 = vpop.f32.mrf.mxu0
    %v376 = vpop.f32.mrf.mxu0
    %377 = vdwg.mxu0
    %v382 = vrot.slane %v331, 6
    %v383 = vrot.slane %v333, 6
    %v384 = vrot.slane %v372, 6
    %v385 = vrot.slane %v374, 6
    %v390 = vadd.f32 %v176, %v382
    %v391 = vadd.f32 %v178, %v383
    %v392 = vadd.f32 %v219, %v384
    %v393 = vadd.f32 %v221, %v385
    %v394 = vxor.u32 %v390, 2147483648
    %v395 = vxor.u32 %v391, 2147483648
    %v396 = vxor.u32 %v392, 2147483648
    %v397 = vmul.f32 %v394, 1.442695
    %v398 = vpow.pop %v397
    %v399 = vmul.f32 %v395, 1.442695
    %v400 = vpow.pop %v399
    %v401 = vmul.f32 %v396, 1.442695
    %v402 = vpow.pop %v401
    %v403 = vadd.f32 %v398, 1.0
    %v404 = vadd.f32 %v400, 1.0
    %v405 = vadd.f32 %v402, 1.0
    %v406 = vrcp.pop %v403
    %v407 = vmul.f32 1.0, %v406
    %v408 = vrcp.pop %v404
    %v409 = vmul.f32 1.0, %v408
    %v410 = vrcp.pop %v405
    %v411 = vmul.f32 1.0, %v410
    %v412 = vtanh.pop %v393
    %v414 = vrot.slane %v248, 6
    %v416 = vmul.f32 %v409, %v414
    %v417 = vmul.f32 %v407, %v412
    %v418 = vadd.f32 %v416, %v417
    %v419 = vtanh.pop %v418
    %v420 = vmul.f32 %v411, %v419
    %v421 = vpack.c.bf16 %v420, %v420
    %v423 = vrot.slane %v421, 1
    %v425 = vsel %vm292, %v423, 0
    %427 = vmatprep.subr.bf16.mxu0 0
    %428 = vmatpush1.bf16.msra.mxu0 0
    %429 = vmatprep.subr.bf16.mxu0 0
    %430 = vmatpush1.bf16.msra.mxu0 0
    %431 = vmatprep.subr.bf16.mxu0 0
    %432 = vmatpush1.bf16.msra.mxu0 0
    %433 = vmatprep.subr.bf16.mxu0 0
    %434 = vmatpush1.bf16.msra.mxu0 0
    %435 = vmatprep.subr.bf16.mxu0 0
    %436 = vmatpush1.bf16.msra.mxu0 0
    %437 = vmatprep.subr.bf16.mxu0 0
    %438 = vmatpush1.bf16.msra.mxu0 0
    %439 = vmatprep.subr.bf16.mxu0 %v281
    %440 = vmatpush1.bf16.msra.mxu0 %v280
    %441 = vmatprep.subr.bf16.mxu0 %v277
    %442 = vmatpush1.bf16.msra.mxu0 %v276
    %443 = vmatprep.subr.bf16.mxu0 0
    %444 = vmatpush2.bf16.msra.mxu0 0
    %445 = vmatprep.subr.bf16.mxu0 0
    %446 = vmatpush2.bf16.msra.mxu0 0
    %447 = vmatprep.subr.bf16.mxu0 0
    %448 = vmatpush2.bf16.msra.mxu0 0
    %449 = vmatprep.subr.bf16.mxu0 0
    %450 = vmatpush2.bf16.msra.mxu0 0
    %451 = vmatprep.subr.bf16.mxu0 0
    %452 = vmatpush2.bf16.msra.mxu0 0
    %453 = vmatprep.subr.bf16.mxu0 0
    %454 = vmatpush2.bf16.msra.mxu0 0
    %455 = vmatprep.subr.bf16.mxu0 0
    %456 = vmatpush2.bf16.msra.mxu0 0
    %457 = vmatprep.subr.bf16.mxu0 0
    %458 = vmatpush2.bf16.msra.mxu0 0
    %459 = vmatprep.mubr.bf16.mxu0 0
    %460 = vmatmul.mubr.bf16.gmra.mxu0 %v425
    %v461 = vpop.f32.mrf.mxu0
    %v462 = vadd.f32 0.0, %v461
    %v463 = vpop.f32.mrf.mxu0
    %v464 = vadd.f32 0.0, %v463
    %v465 = vpop.f32.mrf.mxu0
    %v466 = vpop.f32.mrf.mxu0
    %467 = vdwg.mxu0
    %468 = vmatprep.subr.bf16.mxu0 0
    %469 = vmatpush1.bf16.msra.mxu0 0
    %470 = vmatprep.subr.bf16.mxu0 0
    %471 = vmatpush1.bf16.msra.mxu0 0
    %472 = vmatprep.subr.bf16.mxu0 0
    %473 = vmatpush1.bf16.msra.mxu0 0
    %474 = vmatprep.subr.bf16.mxu0 0
    %475 = vmatpush1.bf16.msra.mxu0 0
    %476 = vmatprep.subr.bf16.mxu0 0
    %477 = vmatpush1.bf16.msra.mxu0 0
    %478 = vmatprep.subr.bf16.mxu0 0
    %479 = vmatpush1.bf16.msra.mxu0 0
    %480 = vmatprep.subr.bf16.mxu0 %v283
    %481 = vmatpush1.bf16.msra.mxu0 %v282
    %482 = vmatprep.subr.bf16.mxu0 %v279
    %483 = vmatpush1.bf16.msra.mxu0 %v278
    %484 = vmatprep.subr.bf16.mxu0 0
    %485 = vmatpush2.bf16.msra.mxu0 0
    %486 = vmatprep.subr.bf16.mxu0 0
    %487 = vmatpush2.bf16.msra.mxu0 0
    %488 = vmatprep.subr.bf16.mxu0 0
    %489 = vmatpush2.bf16.msra.mxu0 0
    %490 = vmatprep.subr.bf16.mxu0 0
    %491 = vmatpush2.bf16.msra.mxu0 0
    %492 = vmatprep.subr.bf16.mxu0 0
    %493 = vmatpush2.bf16.msra.mxu0 0
    %494 = vmatprep.subr.bf16.mxu0 0
    %495 = vmatpush2.bf16.msra.mxu0 0
    %496 = vmatprep.subr.bf16.mxu0 0
    %497 = vmatpush2.bf16.msra.mxu0 0
    %498 = vmatprep.subr.bf16.mxu0 0
    %499 = vmatpush2.bf16.msra.mxu0 0
    %500 = vmatprep.mubr.bf16.mxu0 0
    %501 = vmatmul.mubr.bf16.gmra.mxu0 %v425
    %v502 = vpop.f32.mrf.mxu0
    %v503 = vadd.f32 0.0, %v502
    %v504 = vpop.f32.mrf.mxu0
    %v505 = vadd.f32 0.0, %v504
    %v506 = vpop.f32.mrf.mxu0
    %v507 = vpop.f32.mrf.mxu0
    %508 = vdwg.mxu0
    %v513 = vrot.slane %v462, 4
    %v514 = vrot.slane %v464, 4
    %v515 = vrot.slane %v503, 4
    %v516 = vrot.slane %v505, 4
    %v521 = vadd.f32 %v176, %v513
    %v522 = vadd.f32 %v178, %v514
    %v523 = vadd.f32 %v219, %v515
    %v524 = vadd.f32 %v221, %v516
    %v525 = vxor.u32 %v521, 2147483648
    %v526 = vxor.u32 %v522, 2147483648
    %v527 = vxor.u32 %v523, 2147483648
    %v528 = vmul.f32 %v525, 1.442695
    %v529 = vpow.pop %v528
    %v530 = vmul.f32 %v526, 1.442695
    %v531 = vpow.pop %v530
    %v532 = vmul.f32 %v527, 1.442695
    %v533 = vpow.pop %v532
    %v534 = vadd.f32 %v529, 1.0
    %v535 = vadd.f32 %v531, 1.0
    %v536 = vadd.f32 %v533, 1.0
    %v537 = vrcp.pop %v534
    %v538 = vmul.f32 1.0, %v537
    %v539 = vrcp.pop %v535
    %v540 = vmul.f32 1.0, %v539
    %v541 = vrcp.pop %v536
    %v542 = vmul.f32 1.0, %v541
    %v543 = vtanh.pop %v524
    %v545 = vrot.slane %v418, 6
    %v547 = vmul.f32 %v540, %v545
    %v548 = vmul.f32 %v538, %v543
    %v549 = vadd.f32 %v547, %v548
    %v550 = vtanh.pop %v549
    %v551 = vmul.f32 %v542, %v550
    %v552 = vpack.c.bf16 %v551, %v551
    %v554 = vrot.slane %v552, 2
    %v556 = vsel %vm292, %v554, 0
    %558 = vmatprep.subr.bf16.mxu0 0
    %559 = vmatpush1.bf16.msra.mxu0 0
    %560 = vmatprep.subr.bf16.mxu0 0
    %561 = vmatpush1.bf16.msra.mxu0 0
    %562 = vmatprep.subr.bf16.mxu0 0
    %563 = vmatpush1.bf16.msra.mxu0 0
    %564 = vmatprep.subr.bf16.mxu0 0
    %565 = vmatpush1.bf16.msra.mxu0 0
    %566 = vmatprep.subr.bf16.mxu0 0
    %567 = vmatpush1.bf16.msra.mxu0 0
    %568 = vmatprep.subr.bf16.mxu0 0
    %569 = vmatpush1.bf16.msra.mxu0 0
    %570 = vmatprep.subr.bf16.mxu0 %v281
    %571 = vmatpush1.bf16.msra.mxu0 %v280
    %572 = vmatprep.subr.bf16.mxu0 %v277
    %573 = vmatpush1.bf16.msra.mxu0 %v276
    %574 = vmatprep.subr.bf16.mxu0 0
    %575 = vmatpush2.bf16.msra.mxu0 0
    %576 = vmatprep.subr.bf16.mxu0 0
    %577 = vmatpush2.bf16.msra.mxu0 0
    %578 = vmatprep.subr.bf16.mxu0 0
    %579 = vmatpush2.bf16.msra.mxu0 0
    %580 = vmatprep.subr.bf16.mxu0 0
    %581 = vmatpush2.bf16.msra.mxu0 0
    %582 = vmatprep.subr.bf16.mxu0 0
    %583 = vmatpush2.bf16.msra.mxu0 0
    %584 = vmatprep.subr.bf16.mxu0 0
    %585 = vmatpush2.bf16.msra.mxu0 0
    %586 = vmatprep.subr.bf16.mxu0 0
    %587 = vmatpush2.bf16.msra.mxu0 0
    %588 = vmatprep.subr.bf16.mxu0 0
    %589 = vmatpush2.bf16.msra.mxu0 0
    %590 = vmatprep.mubr.bf16.mxu0 0
    %591 = vmatmul.mubr.bf16.gmra.mxu0 %v556
    %v592 = vpop.f32.mrf.mxu0
    %v593 = vadd.f32 0.0, %v592
    %v594 = vpop.f32.mrf.mxu0
    %v595 = vadd.f32 0.0, %v594
    %v596 = vpop.f32.mrf.mxu0
    %v597 = vpop.f32.mrf.mxu0
    %598 = vdwg.mxu0
    %599 = vmatprep.subr.bf16.mxu0 0
    %600 = vmatpush1.bf16.msra.mxu0 0
    %601 = vmatprep.subr.bf16.mxu0 0
    %602 = vmatpush1.bf16.msra.mxu0 0
    %603 = vmatprep.subr.bf16.mxu0 0
    %604 = vmatpush1.bf16.msra.mxu0 0
    %605 = vmatprep.subr.bf16.mxu0 0
    %606 = vmatpush1.bf16.msra.mxu0 0
    %607 = vmatprep.subr.bf16.mxu0 0
    %608 = vmatpush1.bf16.msra.mxu0 0
    %609 = vmatprep.subr.bf16.mxu0 0
    %610 = vmatpush1.bf16.msra.mxu0 0
    %611 = vmatprep.subr.bf16.mxu0 %v283
    %612 = vmatpush1.bf16.msra.mxu0 %v282
    %613 = vmatprep.subr.bf16.mxu0 %v279
    %614 = vmatpush1.bf16.msra.mxu0 %v278
    %615 = vmatprep.subr.bf16.mxu0 0
    %616 = vmatpush2.bf16.msra.mxu0 0
    %617 = vmatprep.subr.bf16.mxu0 0
    %618 = vmatpush2.bf16.msra.mxu0 0
    %619 = vmatprep.subr.bf16.mxu0 0
    %620 = vmatpush2.bf16.msra.mxu0 0
    %621 = vmatprep.subr.bf16.mxu0 0
    %622 = vmatpush2.bf16.msra.mxu0 0
    %623 = vmatprep.subr.bf16.mxu0 0
    %624 = vmatpush2.bf16.msra.mxu0 0
    %625 = vmatprep.subr.bf16.mxu0 0
    %626 = vmatpush2.bf16.msra.mxu0 0
    %627 = vmatprep.subr.bf16.mxu0 0
    %628 = vmatpush2.bf16.msra.mxu0 0
    %629 = vmatprep.subr.bf16.mxu0 0
    %630 = vmatpush2.bf16.msra.mxu0 0
    %631 = vmatprep.mubr.bf16.mxu0 0
    %632 = vmatmul.mubr.bf16.gmra.mxu0 %v556
    %v633 = vpop.f32.mrf.mxu0
    %v634 = vadd.f32 0.0, %v633
    %v635 = vpop.f32.mrf.mxu0
    %v636 = vadd.f32 0.0, %v635
    %v637 = vpop.f32.mrf.mxu0
    %v638 = vpop.f32.mrf.mxu0
    %639 = vdwg.mxu0
    %v644 = vrot.slane %v593, 2
    %v645 = vrot.slane %v595, 2
    %v646 = vrot.slane %v634, 2
    %v647 = vrot.slane %v636, 2
    %v652 = vadd.f32 %v176, %v644
    %v653 = vadd.f32 %v178, %v645
    %v654 = vadd.f32 %v219, %v646
    %v655 = vadd.f32 %v221, %v647
    %v656 = vxor.u32 %v652, 2147483648
    %v657 = vxor.u32 %v653, 2147483648
    %v658 = vxor.u32 %v654, 2147483648
    %v659 = vmul.f32 %v656, 1.442695
    %v660 = vpow.pop %v659
    %v661 = vmul.f32 %v657, 1.442695
    %v662 = vpow.pop %v661
    %v663 = vmul.f32 %v658, 1.442695
    %v664 = vpow.pop %v663
    %v665 = vadd.f32 %v660, 1.0
    %v666 = vadd.f32 %v662, 1.0
    %v667 = vadd.f32 %v664, 1.0
    %v668 = vrcp.pop %v665
    %v669 = vmul.f32 1.0, %v668
    %v670 = vrcp.pop %v666
    %v671 = vmul.f32 1.0, %v670
    %v672 = vrcp.pop %v667
    %v673 = vmul.f32 1.0, %v672
    %v674 = vtanh.pop %v655
    %v676 = vrot.slane %v549, 6
    %v678 = vmul.f32 %v671, %v676
    %v679 = vmul.f32 %v669, %v674
    %v680 = vadd.f32 %v678, %v679
    %v681 = vtanh.pop %v680
    %v682 = vmul.f32 %v673, %v681
    %v683 = vpack.c.bf16 %v682, %v682
    %v685 = vrot.slane %v683, 3
    %v687 = vsel %vm292, %v685, 0
    %689 = vmatprep.subr.bf16.mxu0 0
    %690 = vmatpush1.bf16.msra.mxu0 0
    %691 = vmatprep.subr.bf16.mxu0 0
    %692 = vmatpush1.bf16.msra.mxu0 0
    %693 = vmatprep.subr.bf16.mxu0 0
    %694 = vmatpush1.bf16.msra.mxu0 0
    %695 = vmatprep.subr.bf16.mxu0 0
    %696 = vmatpush1.bf16.msra.mxu0 0
    %697 = vmatprep.subr.bf16.mxu0 0
    %698 = vmatpush1.bf16.msra.mxu0 0
    %699 = vmatprep.subr.bf16.mxu0 0
    %700 = vmatpush1.bf16.msra.mxu0 0
    %701 = vmatprep.subr.bf16.mxu0 %v281
    %702 = vmatpush1.bf16.msra.mxu0 %v280
    %703 = vmatprep.subr.bf16.mxu0 %v277
    %704 = vmatpush1.bf16.msra.mxu0 %v276
    %705 = vmatprep.subr.bf16.mxu0 0
    %706 = vmatpush2.bf16.msra.mxu0 0
    %707 = vmatprep.subr.bf16.mxu0 0
    %708 = vmatpush2.bf16.msra.mxu0 0
    %709 = vmatprep.subr.bf16.mxu0 0
    %710 = vmatpush2.bf16.msra.mxu0 0
    %711 = vmatprep.subr.bf16.mxu0 0
    %712 = vmatpush2.bf16.msra.mxu0 0
    %713 = vmatprep.subr.bf16.mxu0 0
    %714 = vmatpush2.bf16.msra.mxu0 0
    %715 = vmatprep.subr.bf16.mxu0 0
    %716 = vmatpush2.bf16.msra.mxu0 0
    %717 = vmatprep.subr.bf16.mxu0 0
    %718 = vmatpush2.bf16.msra.mxu0 0
    %719 = vmatprep.subr.bf16.mxu0 0
    %720 = vmatpush2.bf16.msra.mxu0 0
    %721 = vmatprep.mubr.bf16.mxu0 0
    %722 = vmatmul.mubr.bf16.gmra.mxu0 %v687
    %v723 = vpop.f32.mrf.mxu0
    %v724 = vadd.f32 0.0, %v723
    %v725 = vpop.f32.mrf.mxu0
    %v726 = vadd.f32 0.0, %v725
    %v727 = vpop.f32.mrf.mxu0
    %v728 = vpop.f32.mrf.mxu0
    %729 = vdwg.mxu0
    %730 = vmatprep.subr.bf16.mxu0 0
    %731 = vmatpush1.bf16.msra.mxu0 0
    %732 = vmatprep.subr.bf16.mxu0 0
    %733 = vmatpush1.bf16.msra.mxu0 0
    %734 = vmatprep.subr.bf16.mxu0 0
    %735 = vmatpush1.bf16.msra.mxu0 0
    %736 = vmatprep.subr.bf16.mxu0 0
    %737 = vmatpush1.bf16.msra.mxu0 0
    %738 = vmatprep.subr.bf16.mxu0 0
    %739 = vmatpush1.bf16.msra.mxu0 0
    %740 = vmatprep.subr.bf16.mxu0 0
    %741 = vmatpush1.bf16.msra.mxu0 0
    %742 = vmatprep.subr.bf16.mxu0 %v283
    %743 = vmatpush1.bf16.msra.mxu0 %v282
    %744 = vmatprep.subr.bf16.mxu0 %v279
    %745 = vmatpush1.bf16.msra.mxu0 %v278
    %746 = vmatprep.subr.bf16.mxu0 0
    %747 = vmatpush2.bf16.msra.mxu0 0
    %748 = vmatprep.subr.bf16.mxu0 0
    %749 = vmatpush2.bf16.msra.mxu0 0
    %750 = vmatprep.subr.bf16.mxu0 0
    %751 = vmatpush2.bf16.msra.mxu0 0
    %752 = vmatprep.subr.bf16.mxu0 0
    %753 = vmatpush2.bf16.msra.mxu0 0
    %754 = vmatprep.subr.bf16.mxu0 0
    %755 = vmatpush2.bf16.msra.mxu0 0
    %756 = vmatprep.subr.bf16.mxu0 0
    %757 = vmatpush2.bf16.msra.mxu0 0
    %758 = vmatprep.subr.bf16.mxu0 0
    %759 = vmatpush2.bf16.msra.mxu0 0
    %760 = vmatprep.subr.bf16.mxu0 0
    %761 = vmatpush2.bf16.msra.mxu0 0
    %762 = vmatprep.mubr.bf16.mxu0 0
    %763 = vmatmul.mubr.bf16.gmra.mxu0 %v687
    %v764 = vpop.f32.mrf.mxu0
    %v765 = vadd.f32 0.0, %v764
    %v766 = vpop.f32.mrf.mxu0
    %v767 = vadd.f32 0.0, %v766
    %v768 = vpop.f32.mrf.mxu0
    %v769 = vpop.f32.mrf.mxu0
    %770 = vdwg.mxu0
    %v771 = vadd.f32 %v180, %v724
    %v772 = vadd.f32 %v182, %v726
    %v773 = vadd.f32 %v223, %v765
    %v774 = vadd.f32 %v225, %v767
    %v775 = vxor.u32 %v771, 2147483648
    %v776 = vxor.u32 %v772, 2147483648
    %v777 = vxor.u32 %v773, 2147483648
    %v778 = vmul.f32 %v775, 1.442695
    %v779 = vpow.pop %v778
    %v780 = vmul.f32 %v776, 1.442695
    %v781 = vpow.pop %v780
    %v782 = vmul.f32 %v777, 1.442695
    %v783 = vpow.pop %v782
    %v784 = vadd.f32 %v779, 1.0
    %v785 = vadd.f32 %v781, 1.0
    %v786 = vadd.f32 %v783, 1.0
    %v787 = vrcp.pop %v784
    %v788 = vmul.f32 1.0, %v787
    %v789 = vrcp.pop %v785
    %v790 = vmul.f32 1.0, %v789
    %v791 = vrcp.pop %v786
    %v792 = vmul.f32 1.0, %v791
    %v793 = vtanh.pop %v774
    %v795 = vrot.slane %v680, 6
    %v797 = vmul.f32 %v790, %v795
    %v798 = vmul.f32 %v788, %v793
    %v799 = vadd.f32 %v797, %v798
    %v800 = vtanh.pop %v799
    %v801 = vmul.f32 %v792, %v800
    %v802 = vpack.c.bf16 %v801, %v801
    %v804 = vsel %vm292, %v802, 0
    %806 = vmatprep.subr.bf16.mxu0 0
    %807 = vmatpush1.bf16.msra.mxu0 0
    %808 = vmatprep.subr.bf16.mxu0 0
    %809 = vmatpush1.bf16.msra.mxu0 0
    %810 = vmatprep.subr.bf16.mxu0 0
    %811 = vmatpush1.bf16.msra.mxu0 0
    %812 = vmatprep.subr.bf16.mxu0 0
    %813 = vmatpush1.bf16.msra.mxu0 0
    %814 = vmatprep.subr.bf16.mxu0 0
    %815 = vmatpush1.bf16.msra.mxu0 0
    %816 = vmatprep.subr.bf16.mxu0 0
    %817 = vmatpush1.bf16.msra.mxu0 0
    %818 = vmatprep.subr.bf16.mxu0 %v281
    %819 = vmatpush1.bf16.msra.mxu0 %v280
    %820 = vmatprep.subr.bf16.mxu0 %v277
    %821 = vmatpush1.bf16.msra.mxu0 %v276
    %822 = vmatprep.subr.bf16.mxu0 0
    %823 = vmatpush2.bf16.msra.mxu0 0
    %824 = vmatprep.subr.bf16.mxu0 0
    %825 = vmatpush2.bf16.msra.mxu0 0
    %826 = vmatprep.subr.bf16.mxu0 0
    %827 = vmatpush2.bf16.msra.mxu0 0
    %828 = vmatprep.subr.bf16.mxu0 0
    %829 = vmatpush2.bf16.msra.mxu0 0
    %830 = vmatprep.subr.bf16.mxu0 0
    %831 = vmatpush2.bf16.msra.mxu0 0
    %832 = vmatprep.subr.bf16.mxu0 0
    %833 = vmatpush2.bf16.msra.mxu0 0
    %834 = vmatprep.subr.bf16.mxu0 0
    %835 = vmatpush2.bf16.msra.mxu0 0
    %836 = vmatprep.subr.bf16.mxu0 0
    %837 = vmatpush2.bf16.msra.mxu0 0
    %838 = vmatprep.mubr.bf16.mxu0 0
    %839 = vmatmul.mubr.bf16.gmra.mxu0 %v804
    %v840 = vpop.f32.mrf.mxu0
    %v841 = vadd.f32 0.0, %v840
    %v842 = vpop.f32.mrf.mxu0
    %v843 = vadd.f32 0.0, %v842
    %v844 = vpop.f32.mrf.mxu0
    %v845 = vpop.f32.mrf.mxu0
    %846 = vdwg.mxu0
    %847 = vmatprep.subr.bf16.mxu0 0
    %848 = vmatpush1.bf16.msra.mxu0 0
    %849 = vmatprep.subr.bf16.mxu0 0
    %850 = vmatpush1.bf16.msra.mxu0 0
    %851 = vmatprep.subr.bf16.mxu0 0
    %852 = vmatpush1.bf16.msra.mxu0 0
    %853 = vmatprep.subr.bf16.mxu0 0
    %854 = vmatpush1.bf16.msra.mxu0 0
    %855 = vmatprep.subr.bf16.mxu0 0
    %856 = vmatpush1.bf16.msra.mxu0 0
    %857 = vmatprep.subr.bf16.mxu0 0
    %858 = vmatpush1.bf16.msra.mxu0 0
    %859 = vmatprep.subr.bf16.mxu0 %v283
    %860 = vmatpush1.bf16.msra.mxu0 %v282
    %861 = vmatprep.subr.bf16.mxu0 %v279
    %862 = vmatpush1.bf16.msra.mxu0 %v278
    %863 = vmatprep.subr.bf16.mxu0 0
    %864 = vmatpush2.bf16.msra.mxu0 0
    %865 = vmatprep.subr.bf16.mxu0 0
    %866 = vmatpush2.bf16.msra.mxu0 0
    %867 = vmatprep.subr.bf16.mxu0 0
    %868 = vmatpush2.bf16.msra.mxu0 0
    %869 = vmatprep.subr.bf16.mxu0 0
    %870 = vmatpush2.bf16.msra.mxu0 0
    %871 = vmatprep.subr.bf16.mxu0 0
    %872 = vmatpush2.bf16.msra.mxu0 0
    %873 = vmatprep.subr.bf16.mxu0 0
    %874 = vmatpush2.bf16.msra.mxu0 0
    %875 = vmatprep.subr.bf16.mxu0 0
    %876 = vmatpush2.bf16.msra.mxu0 0
    %877 = vmatprep.subr.bf16.mxu0 0
    %878 = vmatpush2.bf16.msra.mxu0 0
    %879 = vmatprep.mubr.bf16.mxu0 0
    %880 = vmatmul.mubr.bf16.gmra.mxu0 %v804
    %v881 = vpop.f32.mrf.mxu0
    %v882 = vadd.f32 0.0, %v881
    %v883 = vpop.f32.mrf.mxu0
    %v884 = vadd.f32 0.0, %v883
    %v885 = vpop.f32.mrf.mxu0
    %v886 = vpop.f32.mrf.mxu0
    %887 = vdwg.mxu0
    %v892 = vrot.slane %v841, 6
    %v893 = vrot.slane %v843, 6
    %v894 = vrot.slane %v882, 6
    %v895 = vrot.slane %v884, 6
    %v900 = vadd.f32 %v180, %v892
    %v901 = vadd.f32 %v182, %v893
    %v902 = vadd.f32 %v223, %v894
    %v903 = vadd.f32 %v225, %v895
    %v904 = vxor.u32 %v900, 2147483648
    %v905 = vxor.u32 %v901, 2147483648
    %v906 = vxor.u32 %v902, 2147483648
    %v907 = vmul.f32 %v904, 1.442695
    %v908 = vpow.pop %v907
    %v909 = vmul.f32 %v905, 1.442695
    %v910 = vpow.pop %v909
    %v911 = vmul.f32 %v906, 1.442695
    %v912 = vpow.pop %v911
    %v913 = vadd.f32 %v908, 1.0
    %v914 = vadd.f32 %v910, 1.0
    %v915 = vadd.f32 %v912, 1.0
    %v916 = vrcp.pop %v913
    %v917 = vmul.f32 1.0, %v916
    %v918 = vrcp.pop %v914
    %v919 = vmul.f32 1.0, %v918
    %v920 = vrcp.pop %v915
    %v921 = vmul.f32 1.0, %v920
    %v922 = vtanh.pop %v903
    %v924 = vrot.slane %v799, 6
    %v926 = vmul.f32 %v919, %v924
    %v927 = vmul.f32 %v917, %v922
    %v928 = vadd.f32 %v926, %v927
    %v929 = vtanh.pop %v928
    %v930 = vmul.f32 %v921, %v929
    %v931 = vpack.c.bf16 %v930, %v930
    %v933 = vrot.slane %v931, 1
    %v935 = vsel %vm292, %v933, 0
    %937 = vmatprep.subr.bf16.mxu0 0
    %938 = vmatpush1.bf16.msra.mxu0 0
    %939 = vmatprep.subr.bf16.mxu0 0
    %940 = vmatpush1.bf16.msra.mxu0 0
    %941 = vmatprep.subr.bf16.mxu0 0
    %942 = vmatpush1.bf16.msra.mxu0 0
    %943 = vmatprep.subr.bf16.mxu0 0
    %944 = vmatpush1.bf16.msra.mxu0 0
    %945 = vmatprep.subr.bf16.mxu0 0
    %946 = vmatpush1.bf16.msra.mxu0 0
    %947 = vmatprep.subr.bf16.mxu0 0
    %948 = vmatpush1.bf16.msra.mxu0 0
    %949 = vmatprep.subr.bf16.mxu0 %v281
    %950 = vmatpush1.bf16.msra.mxu0 %v280
    %951 = vmatprep.subr.bf16.mxu0 %v277
    %952 = vmatpush1.bf16.msra.mxu0 %v276
    %953 = vmatprep.subr.bf16.mxu0 0
    %954 = vmatpush2.bf16.msra.mxu0 0
    %955 = vmatprep.subr.bf16.mxu0 0
    %956 = vmatpush2.bf16.msra.mxu0 0
    %957 = vmatprep.subr.bf16.mxu0 0
    %958 = vmatpush2.bf16.msra.mxu0 0
    %959 = vmatprep.subr.bf16.mxu0 0
    %960 = vmatpush2.bf16.msra.mxu0 0
    %961 = vmatprep.subr.bf16.mxu0 0
    %962 = vmatpush2.bf16.msra.mxu0 0
    %963 = vmatprep.subr.bf16.mxu0 0
    %964 = vmatpush2.bf16.msra.mxu0 0
    %965 = vmatprep.subr.bf16.mxu0 0
    %966 = vmatpush2.bf16.msra.mxu0 0
    %967 = vmatprep.subr.bf16.mxu0 0
    %968 = vmatpush2.bf16.msra.mxu0 0
    %969 = vmatprep.mubr.bf16.mxu0 0
    %970 = vmatmul.mubr.bf16.gmra.mxu0 %v935
    %v971 = vpop.f32.mrf.mxu0
    %v972 = vadd.f32 0.0, %v971
    %v973 = vpop.f32.mrf.mxu0
    %v974 = vadd.f32 0.0, %v973
    %v975 = vpop.f32.mrf.mxu0
    %v976 = vpop.f32.mrf.mxu0
    %977 = vdwg.mxu0
    %978 = vmatprep.subr.bf16.mxu0 0
    %979 = vmatpush1.bf16.msra.mxu0 0
    %980 = vmatprep.subr.bf16.mxu0 0
    %981 = vmatpush1.bf16.msra.mxu0 0
    %982 = vmatprep.subr.bf16.mxu0 0
    %983 = vmatpush1.bf16.msra.mxu0 0
    %984 = vmatprep.subr.bf16.mxu0 0
    %985 = vmatpush1.bf16.msra.mxu0 0
    %986 = vmatprep.subr.bf16.mxu0 0
    %987 = vmatpush1.bf16.msra.mxu0 0
    %988 = vmatprep.subr.bf16.mxu0 0
    %989 = vmatpush1.bf16.msra.mxu0 0
    %990 = vmatprep.subr.bf16.mxu0 %v283
    %991 = vmatpush1.bf16.msra.mxu0 %v282
    %992 = vmatprep.subr.bf16.mxu0 %v279
    %993 = vmatpush1.bf16.msra.mxu0 %v278
    %994 = vmatprep.subr.bf16.mxu0 0
    %995 = vmatpush2.bf16.msra.mxu0 0
    %996 = vmatprep.subr.bf16.mxu0 0
    %997 = vmatpush2.bf16.msra.mxu0 0
    %998 = vmatprep.subr.bf16.mxu0 0
    %999 = vmatpush2.bf16.msra.mxu0 0
    %1000 = vmatprep.subr.bf16.mxu0 0
    %1001 = vmatpush2.bf16.msra.mxu0 0
    %1002 = vmatprep.subr.bf16.mxu0 0
    %1003 = vmatpush2.bf16.msra.mxu0 0
    %1004 = vmatprep.subr.bf16.mxu0 0
    %1005 = vmatpush2.bf16.msra.mxu0 0
    %1006 = vmatprep.subr.bf16.mxu0 0
    %1007 = vmatpush2.bf16.msra.mxu0 0
    %1008 = vmatprep.subr.bf16.mxu0 0
    %1009 = vmatpush2.bf16.msra.mxu0 0
    %1010 = vmatprep.mubr.bf16.mxu0 0
    %1011 = vmatmul.mubr.bf16.gmra.mxu0 %v935
    %v1012 = vpop.f32.mrf.mxu0
    %v1013 = vadd.f32 0.0, %v1012
    %v1014 = vpop.f32.mrf.mxu0
    %v1015 = vadd.f32 0.0, %v1014
    %v1016 = vpop.f32.mrf.mxu0
    %v1017 = vpop.f32.mrf.mxu0
    %1018 = vdwg.mxu0
    %v1023 = vrot.slane %v972, 4
    %v1024 = vrot.slane %v974, 4
    %v1025 = vrot.slane %v1013, 4
    %v1026 = vrot.slane %v1015, 4
    %v1031 = vadd.f32 %v180, %v1023
    %v1032 = vadd.f32 %v182, %v1024
    %v1033 = vadd.f32 %v223, %v1025
    %v1034 = vadd.f32 %v225, %v1026
    %v1035 = vxor.u32 %v1031, 2147483648
    %v1036 = vxor.u32 %v1032, 2147483648
    %v1037 = vxor.u32 %v1033, 2147483648
    %v1038 = vmul.f32 %v1035, 1.442695
    %v1039 = vpow.pop %v1038
    %v1040 = vmul.f32 %v1036, 1.442695
    %v1041 = vpow.pop %v1040
    %v1042 = vmul.f32 %v1037, 1.442695
    %v1043 = vpow.pop %v1042
    %v1044 = vadd.f32 %v1039, 1.0
    %v1045 = vadd.f32 %v1041, 1.0
    %v1046 = vadd.f32 %v1043, 1.0
    %v1047 = vrcp.pop %v1044
    %v1048 = vmul.f32 1.0, %v1047
    %v1049 = vrcp.pop %v1045
    %v1050 = vmul.f32 1.0, %v1049
    %v1051 = vrcp.pop %v1046
    %v1052 = vmul.f32 1.0, %v1051
    %v1053 = vtanh.pop %v1034
    %v1055 = vrot.slane %v928, 6
    %v1057 = vmul.f32 %v1050, %v1055
    %v1058 = vmul.f32 %v1048, %v1053
    %v1059 = vadd.f32 %v1057, %v1058
    %v1060 = vtanh.pop %v1059
    %v1061 = vmul.f32 %v1052, %v1060
    %v1062 = vpack.c.bf16 %v1061, %v1061
    %v1064 = vrot.slane %v1062, 2
    %v1066 = vsel %vm292, %v1064, 0
    %1068 = vmatprep.subr.bf16.mxu0 0
    %1069 = vmatpush1.bf16.msra.mxu0 0
    %1070 = vmatprep.subr.bf16.mxu0 0
    %1071 = vmatpush1.bf16.msra.mxu0 0
    %1072 = vmatprep.subr.bf16.mxu0 0
    %1073 = vmatpush1.bf16.msra.mxu0 0
    %1074 = vmatprep.subr.bf16.mxu0 0
    %1075 = vmatpush1.bf16.msra.mxu0 0
    %1076 = vmatprep.subr.bf16.mxu0 0
    %1077 = vmatpush1.bf16.msra.mxu0 0
    %1078 = vmatprep.subr.bf16.mxu0 0
    %1079 = vmatpush1.bf16.msra.mxu0 0
    %1080 = vmatprep.subr.bf16.mxu0 %v281
    %1081 = vmatpush1.bf16.msra.mxu0 %v280
    %1082 = vmatprep.subr.bf16.mxu0 %v277
    %1083 = vmatpush1.bf16.msra.mxu0 %v276
    %1084 = vmatprep.subr.bf16.mxu0 0
    %1085 = vmatpush2.bf16.msra.mxu0 0
    %1086 = vmatprep.subr.bf16.mxu0 0
    %1087 = vmatpush2.bf16.msra.mxu0 0
    %1088 = vmatprep.subr.bf16.mxu0 0
    %1089 = vmatpush2.bf16.msra.mxu0 0
    %1090 = vmatprep.subr.bf16.mxu0 0
    %1091 = vmatpush2.bf16.msra.mxu0 0
    %1092 = vmatprep.subr.bf16.mxu0 0
    %1093 = vmatpush2.bf16.msra.mxu0 0
    %1094 = vmatprep.subr.bf16.mxu0 0
    %1095 = vmatpush2.bf16.msra.mxu0 0
    %1096 = vmatprep.subr.bf16.mxu0 0
    %1097 = vmatpush2.bf16.msra.mxu0 0
    %1098 = vmatprep.subr.bf16.mxu0 0
    %1099 = vmatpush2.bf16.msra.mxu0 0
    %1100 = vmatprep.mubr.bf16.mxu0 0
    %1101 = vmatmul.mubr.bf16.gmra.mxu0 %v1066
    %v1102 = vpop.f32.mrf.mxu0
    %v1103 = vadd.f32 0.0, %v1102
    %v1104 = vpop.f32.mrf.mxu0
    %v1105 = vadd.f32 0.0, %v1104
    %v1106 = vpop.f32.mrf.mxu0
    %v1107 = vpop.f32.mrf.mxu0
    %1108 = vdwg.mxu0
    %1109 = vmatprep.subr.bf16.mxu0 0
    %1110 = vmatpush1.bf16.msra.mxu0 0
    %1111 = vmatprep.subr.bf16.mxu0 0
    %1112 = vmatpush1.bf16.msra.mxu0 0
    %1113 = vmatprep.subr.bf16.mxu0 0
    %1114 = vmatpush1.bf16.msra.mxu0 0
    %1115 = vmatprep.subr.bf16.mxu0 0
    %1116 = vmatpush1.bf16.msra.mxu0 0
    %1117 = vmatprep.subr.bf16.mxu0 0
    %1118 = vmatpush1.bf16.msra.mxu0 0
    %1119 = vmatprep.subr.bf16.mxu0 0
    %1120 = vmatpush1.bf16.msra.mxu0 0
    %1121 = vmatprep.subr.bf16.mxu0 %v283
    %1122 = vmatpush1.bf16.msra.mxu0 %v282
    %1123 = vmatprep.subr.bf16.mxu0 %v279
    %1124 = vmatpush1.bf16.msra.mxu0 %v278
    %1125 = vmatprep.subr.bf16.mxu0 0
    %1126 = vmatpush2.bf16.msra.mxu0 0
    %1127 = vmatprep.subr.bf16.mxu0 0
    %1128 = vmatpush2.bf16.msra.mxu0 0
    %1129 = vmatprep.subr.bf16.mxu0 0
    %1130 = vmatpush2.bf16.msra.mxu0 0
    %1131 = vmatprep.subr.bf16.mxu0 0
    %1132 = vmatpush2.bf16.msra.mxu0 0
    %1133 = vmatprep.subr.bf16.mxu0 0
    %1134 = vmatpush2.bf16.msra.mxu0 0
    %1135 = vmatprep.subr.bf16.mxu0 0
    %1136 = vmatpush2.bf16.msra.mxu0 0
    %1137 = vmatprep.subr.bf16.mxu0 0
    %1138 = vmatpush2.bf16.msra.mxu0 0
    %1139 = vmatprep.subr.bf16.mxu0 0
    %1140 = vmatpush2.bf16.msra.mxu0 0
    %1141 = vmatprep.mubr.bf16.mxu0 0
    %1142 = vmatmul.mubr.bf16.gmra.mxu0 %v1066
    %v1143 = vpop.f32.mrf.mxu0
    %v1144 = vadd.f32 0.0, %v1143
    %v1145 = vpop.f32.mrf.mxu0
    %v1146 = vadd.f32 0.0, %v1145
    %v1147 = vpop.f32.mrf.mxu0
    %v1148 = vpop.f32.mrf.mxu0
    %1149 = vdwg.mxu0
    %v1154 = vrot.slane %v1103, 2
    %v1155 = vrot.slane %v1105, 2
    %v1156 = vrot.slane %v1144, 2
    %v1157 = vrot.slane %v1146, 2
    %v1162 = vadd.f32 %v180, %v1154
    %v1163 = vadd.f32 %v182, %v1155
    %v1164 = vadd.f32 %v223, %v1156
    %v1165 = vadd.f32 %v225, %v1157
    %v1166 = vxor.u32 %v1162, 2147483648
    %v1167 = vxor.u32 %v1163, 2147483648
    %v1168 = vxor.u32 %v1164, 2147483648
    %v1169 = vmul.f32 %v1166, 1.442695
    %v1170 = vpow.pop %v1169
    %v1171 = vmul.f32 %v1167, 1.442695
    %v1172 = vpow.pop %v1171
    %v1173 = vmul.f32 %v1168, 1.442695
    %v1174 = vpow.pop %v1173
    %v1175 = vadd.f32 %v1170, 1.0
    %v1176 = vadd.f32 %v1172, 1.0
    %v1177 = vadd.f32 %v1174, 1.0
    %v1178 = vrcp.pop %v1175
    %v1179 = vmul.f32 1.0, %v1178
    %v1180 = vrcp.pop %v1176
    %v1181 = vmul.f32 1.0, %v1180
    %v1182 = vrcp.pop %v1177
    %v1183 = vmul.f32 1.0, %v1182
    %v1184 = vtanh.pop %v1165
    %v1186 = vrot.slane %v1059, 6
    %v1188 = vmul.f32 %v1181, %v1186
    %v1189 = vmul.f32 %v1179, %v1184
    %v1190 = vadd.f32 %v1188, %v1189
    %v1191 = vtanh.pop %v1190
    %v1192 = vmul.f32 %v1183, %v1191
    %v1193 = vsel %vm128, %v250, %v420
    %vm1194 = vcmask 1043456
    %v1195 = vsel %vm1194, %v1193, %v551
    %vm1196 = vcmask 1045504
    %v1197 = vsel %vm1196, %v1195, %v682
    %v1198 = vsel %vm128, %v801, %v930
    %v1199 = vsel %vm1194, %v1198, %v1061
    %v1200 = vsel %vm1196, %v1199, %v1192
    %v1201 = vpack.c.bf16 %v1200, %v1197
    %v1202 = vld [vmem:[#allocation5] sm:$0xff]
    %v1203 = vld [vmem:[#allocation5 + $0x8] sm:$0xff]
    %v1204 = vld [vmem:[#allocation5 + $0x10] sm:$0xff]
    %v1205 = vld [vmem:[#allocation5 + $0x18] sm:$0xff]
    %v1206 = vld [vmem:[#allocation5 + $0x20] sm:$0xff]
    %v1207 = vld [vmem:[#allocation5 + $0x28] sm:$0xff]
    %v1208 = vld [vmem:[#allocation5 + $0x30] sm:$0xff]
    %v1209 = vld [vmem:[#allocation5 + $0x38] sm:$0xff]
    %v1210 = vld [vmem:[#allocation7] sm:$0xff]
    %v1211 = vld [vmem:[#allocation7 + $0x8] sm:$0xff]
    %v1212 = vld [vmem:[#allocation7 + $0x10] sm:$0xff]
    %v1213 = vld [vmem:[#allocation7 + $0x18] sm:$0xff]
    %v1214 = vld [vmem:[#allocation7 + $0x20] sm:$0xff]
    %v1215 = vld [vmem:[#allocation7 + $0x28] sm:$0xff]
    %v1216 = vld [vmem:[#allocation7 + $0x30] sm:$0xff]
    %v1217 = vld [vmem:[#allocation7 + $0x38] sm:$0xff]
    %v1218 = vld [vmem:[%s6] sm:$0xf]
    %v1220 = vlaneseq
    %v1221 = vshrl.u32 %v1220, 7
    %v1222 = vsub.s32 0, %v1221
    %v1223 = vrot.slane %v1218, %v1222
    %v1224 = vlaneseq
    %v1225 = vshrl.u32 %v1224, 7
    %v1226 = vsub.s32 1, %v1225
    %v1227 = vrot.slane %v1218, %v1226
    %v1228 = vlaneseq
    %v1229 = vshrl.u32 %v1228, 7
    %v1230 = vsub.s32 2, %v1229
    %v1231 = vrot.slane %v1218, %v1230
    %v1232 = vlaneseq
    %v1233 = vshrl.u32 %v1232, 7
    %v1234 = vsub.s32 3, %v1233
    %v1235 = vrot.slane %v1218, %v1234
    %v1248 = vunpack.c.l.b16 %v1202
    %v1249 = vunpack.c.h.b16 %v1202
    %v1250 = vunpack.c.l.b16 %v1203
    %v1251 = vunpack.c.h.b16 %v1203
    %v1252 = vunpack.c.l.b16 %v1204
    %v1253 = vunpack.c.h.b16 %v1204
    %v1254 = vunpack.c.l.b16 %v1205
    %v1255 = vunpack.c.h.b16 %v1205
    %v1256 = vunpack.c.l.b16 %v1206
    %v1257 = vunpack.c.h.b16 %v1206
    %v1258 = vunpack.c.l.b16 %v1207
    %v1259 = vunpack.c.h.b16 %v1207
    %v1260 = vunpack.c.l.b16 %v1208
    %v1261 = vunpack.c.h.b16 %v1208
    %v1262 = vunpack.c.l.b16 %v1209
    %v1263 = vunpack.c.h.b16 %v1209
    %v1264 = vpack.c.b16 %v1252, %v1248
    %v1265 = vpack.c.b16 %v1253, %v1249
    %v1266 = vpack.c.b16 %v1254, %v1250
    %v1267 = vpack.c.b16 %v1255, %v1251
    %v1268 = vpack.c.b16 %v1260, %v1256
    %v1269 = vpack.c.b16 %v1261, %v1257
    %v1270 = vpack.c.b16 %v1262, %v1258
    %v1271 = vpack.c.b16 %v1263, %v1259
    %v1281 = vsel %vm292, %v1201, 0
    %1283 = vmatprep.subr.bf16.mxu0 0
    %1284 = vmatpush1.bf16.msra.mxu0 0
    %1285 = vmatprep.subr.bf16.mxu0 0
    %1286 = vmatpush1.bf16.msra.mxu0 0
    %1287 = vmatprep.subr.bf16.mxu0 0
    %1288 = vmatpush1.bf16.msra.mxu0 0
    %1289 = vmatprep.subr.bf16.mxu0 0
    %1290 = vmatpush1.bf16.msra.mxu0 0
    %1291 = vmatprep.subr.bf16.mxu0 0
    %1292 = vmatpush1.bf16.msra.mxu0 0
    %1293 = vmatprep.subr.bf16.mxu0 0
    %1294 = vmatpush1.bf16.msra.mxu0 0
    %1295 = vmatprep.subr.bf16.mxu0 %v1269
    %1296 = vmatpush1.bf16.msra.mxu0 %v1268
    %1297 = vmatprep.subr.bf16.mxu0 %v1265
    %1298 = vmatpush1.bf16.msra.mxu0 %v1264
    %1299 = vmatprep.subr.bf16.mxu0 0
    %1300 = vmatpush2.bf16.msra.mxu0 0
    %1301 = vmatprep.subr.bf16.mxu0 0
    %1302 = vmatpush2.bf16.msra.mxu0 0
    %1303 = vmatprep.subr.bf16.mxu0 0
    %1304 = vmatpush2.bf16.msra.mxu0 0
    %1305 = vmatprep.subr.bf16.mxu0 0
    %1306 = vmatpush2.bf16.msra.mxu0 0
    %1307 = vmatprep.subr.bf16.mxu0 0
    %1308 = vmatpush2.bf16.msra.mxu0 0
    %1309 = vmatprep.subr.bf16.mxu0 0
    %1310 = vmatpush2.bf16.msra.mxu0 0
    %1311 = vmatprep.subr.bf16.mxu0 0
    %1312 = vmatpush2.bf16.msra.mxu0 0
    %1313 = vmatprep.subr.bf16.mxu0 0
    %1314 = vmatpush2.bf16.msra.mxu0 0
    %1315 = vmatprep.mubr.bf16.mxu0 0
    %1316 = vmatmul.mubr.bf16.gmra.mxu0 %v1281
    %v1317 = vpop.f32.mrf.mxu0
    %v1318 = vadd.f32 %v1223, %v1317
    %v1319 = vpop.f32.mrf.mxu0
    %v1320 = vadd.f32 %v1227, %v1319
    %v1321 = vpop.f32.mrf.mxu0
    %v1322 = vadd.f32 %v1223, %v1321
    %v1323 = vpop.f32.mrf.mxu0
    %v1324 = vadd.f32 %v1227, %v1323
    %1325 = vdwg.mxu0
    %1326 = vmatprep.subr.bf16.mxu0 0
    %1327 = vmatpush1.bf16.msra.mxu0 0
    %1328 = vmatprep.subr.bf16.mxu0 0
    %1329 = vmatpush1.bf16.msra.mxu0 0
    %1330 = vmatprep.subr.bf16.mxu0 0
    %1331 = vmatpush1.bf16.msra.mxu0 0
    %1332 = vmatprep.subr.bf16.mxu0 0
    %1333 = vmatpush1.bf16.msra.mxu0 0
    %1334 = vmatprep.subr.bf16.mxu0 0
    %1335 = vmatpush1.bf16.msra.mxu0 0
    %1336 = vmatprep.subr.bf16.mxu0 0
    %1337 = vmatpush1.bf16.msra.mxu0 0
    %1338 = vmatprep.subr.bf16.mxu0 %v1271
    %1339 = vmatpush1.bf16.msra.mxu0 %v1270
    %1340 = vmatprep.subr.bf16.mxu0 %v1267
    %1341 = vmatpush1.bf16.msra.mxu0 %v1266
    %1342 = vmatprep.subr.bf16.mxu0 0
    %1343 = vmatpush2.bf16.msra.mxu0 0
    %1344 = vmatprep.subr.bf16.mxu0 0
    %1345 = vmatpush2.bf16.msra.mxu0 0
    %1346 = vmatprep.subr.bf16.mxu0 0
    %1347 = vmatpush2.bf16.msra.mxu0 0
    %1348 = vmatprep.subr.bf16.mxu0 0
    %1349 = vmatpush2.bf16.msra.mxu0 0
    %1350 = vmatprep.subr.bf16.mxu0 0
    %1351 = vmatpush2.bf16.msra.mxu0 0
    %1352 = vmatprep.subr.bf16.mxu0 0
    %1353 = vmatpush2.bf16.msra.mxu0 0
    %1354 = vmatprep.subr.bf16.mxu0 0
    %1355 = vmatpush2.bf16.msra.mxu0 0
    %1356 = vmatprep.subr.bf16.mxu0 0
    %1357 = vmatpush2.bf16.msra.mxu0 0
    %1358 = vmatprep.mubr.bf16.mxu0 0
    %1359 = vmatmul.mubr.bf16.gmra.mxu0 %v1281
    %v1360 = vpop.f32.mrf.mxu0
    %v1361 = vadd.f32 %v1231, %v1360
    %v1362 = vpop.f32.mrf.mxu0
    %v1363 = vadd.f32 %v1235, %v1362
    %v1364 = vpop.f32.mrf.mxu0
    %v1365 = vadd.f32 %v1231, %v1364
    %v1366 = vpop.f32.mrf.mxu0
    %v1367 = vadd.f32 %v1235, %v1366
    %1368 = vdwg.mxu0
    %v1369 = vxor.u32 %v1318, 2147483648
    %v1370 = vxor.u32 %v1320, 2147483648
    %v1371 = vxor.u32 %v1361, 2147483648
    %v1372 = vmul.f32 %v1369, 1.442695
    %v1373 = vpow.pop %v1372
    %v1374 = vmul.f32 %v1370, 1.442695
    %v1375 = vpow.pop %v1374
    %v1376 = vmul.f32 %v1371, 1.442695
    %v1377 = vpow.pop %v1376
    %v1378 = vadd.f32 %v1373, 1.0
    %v1379 = vadd.f32 %v1375, 1.0
    %v1380 = vadd.f32 %v1377, 1.0
    %v1381 = vrcp.pop %v1378
    %v1382 = vmul.f32 1.0, %v1381
    %v1383 = vrcp.pop %v1379
    %v1384 = vmul.f32 1.0, %v1383
    %v1385 = vrcp.pop %v1380
    %v1386 = vmul.f32 1.0, %v1385
    %v1387 = vtanh.pop %v1363
    %v1388 = vmul.f32 %v1384, 0.0
    %v1389 = vmul.f32 %v1382, %v1387
    %v1390 = vadd.f32 %v1388, %v1389
    %v1391 = vtanh.pop %v1390
    %v1392 = vmul.f32 %v1386, %v1391
    %v1393 = vpack.c.bf16 %v1392, %v1392
    %v1402 = vunpack.c.l.b16 %v1210
    %v1403 = vunpack.c.h.b16 %v1210
    %v1404 = vunpack.c.l.b16 %v1211
    %v1405 = vunpack.c.h.b16 %v1211
    %v1406 = vunpack.c.l.b16 %v1212
    %v1407 = vunpack.c.h.b16 %v1212
    %v1408 = vunpack.c.l.b16 %v1213
    %v1409 = vunpack.c.h.b16 %v1213
    %v1410 = vunpack.c.l.b16 %v1214
    %v1411 = vunpack.c.h.b16 %v1214
    %v1412 = vunpack.c.l.b16 %v1215
    %v1413 = vunpack.c.h.b16 %v1215
    %v1414 = vunpack.c.l.b16 %v1216
    %v1415 = vunpack.c.h.b16 %v1216
    %v1416 = vunpack.c.l.b16 %v1217
    %v1417 = vunpack.c.h.b16 %v1217
    %v1418 = vpack.c.b16 %v1406, %v1402
    %v1419 = vpack.c.b16 %v1407, %v1403
    %v1420 = vpack.c.b16 %v1408, %v1404
    %v1421 = vpack.c.b16 %v1409, %v1405
    %v1422 = vpack.c.b16 %v1414, %v1410
    %v1423 = vpack.c.b16 %v1415, %v1411
    %v1424 = vpack.c.b16 %v1416, %v1412
    %v1425 = vpack.c.b16 %v1417, %v1413
    %v1435 = vsel %vm292, %v1393, 0
    %1437 = vmatprep.subr.bf16.mxu0 0
    %1438 = vmatpush1.bf16.msra.mxu0 0
    %1439 = vmatprep.subr.bf16.mxu0 0
    %1440 = vmatpush1.bf16.msra.mxu0 0
    %1441 = vmatprep.subr.bf16.mxu0 0
    %1442 = vmatpush1.bf16.msra.mxu0 0
    %1443 = vmatprep.subr.bf16.mxu0 0
    %1444 = vmatpush1.bf16.msra.mxu0 0
    %1445 = vmatprep.subr.bf16.mxu0 0
    %1446 = vmatpush1.bf16.msra.mxu0 0
    %1447 = vmatprep.subr.bf16.mxu0 0
    %1448 = vmatpush1.bf16.msra.mxu0 0
    %1449 = vmatprep.subr.bf16.mxu0 %v1423
    %1450 = vmatpush1.bf16.msra.mxu0 %v1422
    %1451 = vmatprep.subr.bf16.mxu0 %v1419
    %1452 = vmatpush1.bf16.msra.mxu0 %v1418
    %1453 = vmatprep.subr.bf16.mxu0 0
    %1454 = vmatpush2.bf16.msra.mxu0 0
    %1455 = vmatprep.subr.bf16.mxu0 0
    %1456 = vmatpush2.bf16.msra.mxu0 0
    %1457 = vmatprep.subr.bf16.mxu0 0
    %1458 = vmatpush2.bf16.msra.mxu0 0
    %1459 = vmatprep.subr.bf16.mxu0 0
    %1460 = vmatpush2.bf16.msra.mxu0 0
    %1461 = vmatprep.subr.bf16.mxu0 0
    %1462 = vmatpush2.bf16.msra.mxu0 0
    %1463 = vmatprep.subr.bf16.mxu0 0
    %1464 = vmatpush2.bf16.msra.mxu0 0
    %1465 = vmatprep.subr.bf16.mxu0 0
    %1466 = vmatpush2.bf16.msra.mxu0 0
    %1467 = vmatprep.subr.bf16.mxu0 0
    %1468 = vmatpush2.bf16.msra.mxu0 0
    %1469 = vmatprep.mubr.bf16.mxu0 0
    %1470 = vmatmul.mubr.bf16.gmra.mxu0 %v1435
    %v1471 = vpop.f32.mrf.mxu0
    %v1472 = vadd.f32 0.0, %v1471
    %v1473 = vpop.f32.mrf.mxu0
    %v1474 = vadd.f32 0.0, %v1473
    %v1475 = vpop.f32.mrf.mxu0
    %v1476 = vpop.f32.mrf.mxu0
    %1477 = vdwg.mxu0
    %1478 = vmatprep.subr.bf16.mxu0 0
    %1479 = vmatpush1.bf16.msra.mxu0 0
    %1480 = vmatprep.subr.bf16.mxu0 0
    %1481 = vmatpush1.bf16.msra.mxu0 0
    %1482 = vmatprep.subr.bf16.mxu0 0
    %1483 = vmatpush1.bf16.msra.mxu0 0
    %1484 = vmatprep.subr.bf16.mxu0 0
    %1485 = vmatpush1.bf16.msra.mxu0 0
    %1486 = vmatprep.subr.bf16.mxu0 0
    %1487 = vmatpush1.bf16.msra.mxu0 0
    %1488 = vmatprep.subr.bf16.mxu0 0
    %1489 = vmatpush1.bf16.msra.mxu0 0
    %1490 = vmatprep.subr.bf16.mxu0 %v1425
    %1491 = vmatpush1.bf16.msra.mxu0 %v1424
    %1492 = vmatprep.subr.bf16.mxu0 %v1421
    %1493 = vmatpush1.bf16.msra.mxu0 %v1420
    %1494 = vmatprep.subr.bf16.mxu0 0
    %1495 = vmatpush2.bf16.msra.mxu0 0
    %1496 = vmatprep.subr.bf16.mxu0 0
    %1497 = vmatpush2.bf16.msra.mxu0 0
    %1498 = vmatprep.subr.bf16.mxu0 0
    %1499 = vmatpush2.bf16.msra.mxu0 0
    %1500 = vmatprep.subr.bf16.mxu0 0
    %1501 = vmatpush2.bf16.msra.mxu0 0
    %1502 = vmatprep.subr.bf16.mxu0 0
    %1503 = vmatpush2.bf16.msra.mxu0 0
    %1504 = vmatprep.subr.bf16.mxu0 0
    %1505 = vmatpush2.bf16.msra.mxu0 0
    %1506 = vmatprep.subr.bf16.mxu0 0
    %1507 = vmatpush2.bf16.msra.mxu0 0
    %1508 = vmatprep.subr.bf16.mxu0 0
    %1509 = vmatpush2.bf16.msra.mxu0 0
    %1510 = vmatprep.mubr.bf16.mxu0 0
    %1511 = vmatmul.mubr.bf16.gmra.mxu0 %v1435
    %v1512 = vpop.f32.mrf.mxu0
    %v1513 = vadd.f32 0.0, %v1512
    %v1514 = vpop.f32.mrf.mxu0
    %v1515 = vadd.f32 0.0, %v1514
    %v1516 = vpop.f32.mrf.mxu0
    %v1517 = vpop.f32.mrf.mxu0
    %1518 = vdwg.mxu0
    %v1523 = vrot.slane %v1472, 6
    %v1524 = vrot.slane %v1474, 6
    %v1525 = vrot.slane %v1513, 6
    %v1526 = vrot.slane %v1515, 6
    %v1531 = vadd.f32 %v1318, %v1523
    %v1532 = vadd.f32 %v1320, %v1524
    %v1533 = vadd.f32 %v1361, %v1525
    %v1534 = vadd.f32 %v1363, %v1526
    %v1535 = vxor.u32 %v1531, 2147483648
    %v1536 = vxor.u32 %v1532, 2147483648
    %v1537 = vxor.u32 %v1533, 2147483648
    %v1538 = vmul.f32 %v1535, 1.442695
    %v1539 = vpow.pop %v1538
    %v1540 = vmul.f32 %v1536, 1.442695
    %v1541 = vpow.pop %v1540
    %v1542 = vmul.f32 %v1537, 1.442695
    %v1543 = vpow.pop %v1542
    %v1544 = vadd.f32 %v1539, 1.0
    %v1545 = vadd.f32 %v1541, 1.0
    %v1546 = vadd.f32 %v1543, 1.0
    %v1547 = vrcp.pop %v1544
    %v1548 = vmul.f32 1.0, %v1547
    %v1549 = vrcp.pop %v1545
    %v1550 = vmul.f32 1.0, %v1549
    %v1551 = vrcp.pop %v1546
    %v1552 = vmul.f32 1.0, %v1551
    %v1553 = vtanh.pop %v1534
    %v1555 = vrot.slane %v1390, 6
    %v1557 = vmul.f32 %v1550, %v1555
    %v1558 = vmul.f32 %v1548, %v1553
    %v1559 = vadd.f32 %v1557, %v1558
    %v1560 = vtanh.pop %v1559
    %v1561 = vmul.f32 %v1552, %v1560
    %v1562 = vpack.c.bf16 %v1561, %v1561
    %v1564 = vrot.slane %v1562, 1
    %v1566 = vsel %vm292, %v1564, 0
    %1568 = vmatprep.subr.bf16.mxu0 0
    %1569 = vmatpush1.bf16.msra.mxu0 0
    %1570 = vmatprep.subr.bf16.mxu0 0
    %1571 = vmatpush1.bf16.msra.mxu0 0
    %1572 = vmatprep.subr.bf16.mxu0 0
    %1573 = vmatpush1.bf16.msra.mxu0 0
    %1574 = vmatprep.subr.bf16.mxu0 0
    %1575 = vmatpush1.bf16.msra.mxu0 0
    %1576 = vmatprep.subr.bf16.mxu0 0
    %1577 = vmatpush1.bf16.msra.mxu0 0
    %1578 = vmatprep.subr.bf16.mxu0 0
    %1579 = vmatpush1.bf16.msra.mxu0 0
    %1580 = vmatprep.subr.bf16.mxu0 %v1423
    %1581 = vmatpush1.bf16.msra.mxu0 %v1422
    %1582 = vmatprep.subr.bf16.mxu0 %v1419
    %1583 = vmatpush1.bf16.msra.mxu0 %v1418
    %1584 = vmatprep.subr.bf16.mxu0 0
    %1585 = vmatpush2.bf16.msra.mxu0 0
    %1586 = vmatprep.subr.bf16.mxu0 0
    %1587 = vmatpush2.bf16.msra.mxu0 0
    %1588 = vmatprep.subr.bf16.mxu0 0
    %1589 = vmatpush2.bf16.msra.mxu0 0
    %1590 = vmatprep.subr.bf16.mxu0 0
    %1591 = vmatpush2.bf16.msra.mxu0 0
    %1592 = vmatprep.subr.bf16.mxu0 0
    %1593 = vmatpush2.bf16.msra.mxu0 0
    %1594 = vmatprep.subr.bf16.mxu0 0
    %1595 = vmatpush2.bf16.msra.mxu0 0
    %1596 = vmatprep.subr.bf16.mxu0 0
    %1597 = vmatpush2.bf16.msra.mxu0 0
    %1598 = vmatprep.subr.bf16.mxu0 0
    %1599 = vmatpush2.bf16.msra.mxu0 0
    %1600 = vmatprep.mubr.bf16.mxu0 0
    %1601 = vmatmul.mubr.bf16.gmra.mxu0 %v1566
    %v1602 = vpop.f32.mrf.mxu0
    %v1603 = vadd.f32 0.0, %v1602
    %v1604 = vpop.f32.mrf.mxu0
    %v1605 = vadd.f32 0.0, %v1604
    %v1606 = vpop.f32.mrf.mxu0
    %v1607 = vpop.f32.mrf.mxu0
    %1608 = vdwg.mxu0
    %1609 = vmatprep.subr.bf16.mxu0 0
    %1610 = vmatpush1.bf16.msra.mxu0 0
    %1611 = vmatprep.subr.bf16.mxu0 0
    %1612 = vmatpush1.bf16.msra.mxu0 0
    %1613 = vmatprep.subr.bf16.mxu0 0
    %1614 = vmatpush1.bf16.msra.mxu0 0
    %1615 = vmatprep.subr.bf16.mxu0 0
    %1616 = vmatpush1.bf16.msra.mxu0 0
    %1617 = vmatprep.subr.bf16.mxu0 0
    %1618 = vmatpush1.bf16.msra.mxu0 0
    %1619 = vmatprep.subr.bf16.mxu0 0
    %1620 = vmatpush1.bf16.msra.mxu0 0
    %1621 = vmatprep.subr.bf16.mxu0 %v1425
    %1622 = vmatpush1.bf16.msra.mxu0 %v1424
    %1623 = vmatprep.subr.bf16.mxu0 %v1421
    %1624 = vmatpush1.bf16.msra.mxu0 %v1420
    %1625 = vmatprep.subr.bf16.mxu0 0
    %1626 = vmatpush2.bf16.msra.mxu0 0
    %1627 = vmatprep.subr.bf16.mxu0 0
    %1628 = vmatpush2.bf16.msra.mxu0 0
    %1629 = vmatprep.subr.bf16.mxu0 0
    %1630 = vmatpush2.bf16.msra.mxu0 0
    %1631 = vmatprep.subr.bf16.mxu0 0
    %1632 = vmatpush2.bf16.msra.mxu0 0
    %1633 = vmatprep.subr.bf16.mxu0 0
    %1634 = vmatpush2.bf16.msra.mxu0 0
    %1635 = vmatprep.subr.bf16.mxu0 0
    %1636 = vmatpush2.bf16.msra.mxu0 0
    %1637 = vmatprep.subr.bf16.mxu0 0
    %1638 = vmatpush2.bf16.msra.mxu0 0
    %1639 = vmatprep.subr.bf16.mxu0 0
    %1640 = vmatpush2.bf16.msra.mxu0 0
    %1641 = vmatprep.mubr.bf16.mxu0 0
    %1642 = vmatmul.mubr.bf16.gmra.mxu0 %v1566
    %v1643 = vpop.f32.mrf.mxu0
    %v1644 = vadd.f32 0.0, %v1643
    %v1645 = vpop.f32.mrf.mxu0
    %v1646 = vadd.f32 0.0, %v1645
    %v1647 = vpop.f32.mrf.mxu0
    %v1648 = vpop.f32.mrf.mxu0
    %1649 = vdwg.mxu0
    %v1654 = vrot.slane %v1603, 4
    %v1655 = vrot.slane %v1605, 4
    %v1656 = vrot.slane %v1644, 4
    %v1657 = vrot.slane %v1646, 4
    %v1662 = vadd.f32 %v1318, %v1654
    %v1663 = vadd.f32 %v1320, %v1655
    %v1664 = vadd.f32 %v1361, %v1656
    %v1665 = vadd.f32 %v1363, %v1657
    %v1666 = vxor.u32 %v1662, 2147483648
    %v1667 = vxor.u32 %v1663, 2147483648
    %v1668 = vxor.u32 %v1664, 2147483648
    %v1669 = vmul.f32 %v1666, 1.442695
    %v1670 = vpow.pop %v1669
    %v1671 = vmul.f32 %v1667, 1.442695
    %v1672 = vpow.pop %v1671
    %v1673 = vmul.f32 %v1668, 1.442695
    %v1674 = vpow.pop %v1673
    %v1675 = vadd.f32 %v1670, 1.0
    %v1676 = vadd.f32 %v1672, 1.0
    %v1677 = vadd.f32 %v1674, 1.0
    %v1678 = vrcp.pop %v1675
    %v1679 = vmul.f32 1.0, %v1678
    %v1680 = vrcp.pop %v1676
    %v1681 = vmul.f32 1.0, %v1680
    %v1682 = vrcp.pop %v1677
    %v1683 = vmul.f32 1.0, %v1682
    %v1684 = vtanh.pop %v1665
    %v1686 = vrot.slane %v1559, 6
    %v1688 = vmul.f32 %v1681, %v1686
    %v1689 = vmul.f32 %v1679, %v1684
    %v1690 = vadd.f32 %v1688, %v1689
    %v1691 = vtanh.pop %v1690
    %v1692 = vmul.f32 %v1683, %v1691
    %v1693 = vpack.c.bf16 %v1692, %v1692
    %v1695 = vrot.slane %v1693, 2
    %v1697 = vsel %vm292, %v1695, 0
    %1699 = vmatprep.subr.bf16.mxu0 0
    %1700 = vmatpush1.bf16.msra.mxu0 0
    %1701 = vmatprep.subr.bf16.mxu0 0
    %1702 = vmatpush1.bf16.msra.mxu0 0
    %1703 = vmatprep.subr.bf16.mxu0 0
    %1704 = vmatpush1.bf16.msra.mxu0 0
    %1705 = vmatprep.subr.bf16.mxu0 0
    %1706 = vmatpush1.bf16.msra.mxu0 0
    %1707 = vmatprep.subr.bf16.mxu0 0
    %1708 = vmatpush1.bf16.msra.mxu0 0
    %1709 = vmatprep.subr.bf16.mxu0 0
    %1710 = vmatpush1.bf16.msra.mxu0 0
    %1711 = vmatprep.subr.bf16.mxu0 %v1423
    %1712 = vmatpush1.bf16.msra.mxu0 %v1422
    %1713 = vmatprep.subr.bf16.mxu0 %v1419
    %1714 = vmatpush1.bf16.msra.mxu0 %v1418
    %1715 = vmatprep.subr.bf16.mxu0 0
    %1716 = vmatpush2.bf16.msra.mxu0 0
    %1717 = vmatprep.subr.bf16.mxu0 0
    %1718 = vmatpush2.bf16.msra.mxu0 0
    %1719 = vmatprep.subr.bf16.mxu0 0
    %1720 = vmatpush2.bf16.msra.mxu0 0
    %1721 = vmatprep.subr.bf16.mxu0 0
    %1722 = vmatpush2.bf16.msra.mxu0 0
    %1723 = vmatprep.subr.bf16.mxu0 0
    %1724 = vmatpush2.bf16.msra.mxu0 0
    %1725 = vmatprep.subr.bf16.mxu0 0
    %1726 = vmatpush2.bf16.msra.mxu0 0
    %1727 = vmatprep.subr.bf16.mxu0 0
    %1728 = vmatpush2.bf16.msra.mxu0 0
    %1729 = vmatprep.subr.bf16.mxu0 0
    %1730 = vmatpush2.bf16.msra.mxu0 0
    %1731 = vmatprep.mubr.bf16.mxu0 0
    %1732 = vmatmul.mubr.bf16.gmra.mxu0 %v1697
    %v1733 = vpop.f32.mrf.mxu0
    %v1734 = vadd.f32 0.0, %v1733
    %v1735 = vpop.f32.mrf.mxu0
    %v1736 = vadd.f32 0.0, %v1735
    %v1737 = vpop.f32.mrf.mxu0
    %v1738 = vpop.f32.mrf.mxu0
    %1739 = vdwg.mxu0
    %1740 = vmatprep.subr.bf16.mxu0 0
    %1741 = vmatpush1.bf16.msra.mxu0 0
    %1742 = vmatprep.subr.bf16.mxu0 0
    %1743 = vmatpush1.bf16.msra.mxu0 0
    %1744 = vmatprep.subr.bf16.mxu0 0
    %1745 = vmatpush1.bf16.msra.mxu0 0
    %1746 = vmatprep.subr.bf16.mxu0 0
    %1747 = vmatpush1.bf16.msra.mxu0 0
    %1748 = vmatprep.subr.bf16.mxu0 0
    %1749 = vmatpush1.bf16.msra.mxu0 0
    %1750 = vmatprep.subr.bf16.mxu0 0
    %1751 = vmatpush1.bf16.msra.mxu0 0
    %1752 = vmatprep.subr.bf16.mxu0 %v1425
    %1753 = vmatpush1.bf16.msra.mxu0 %v1424
    %1754 = vmatprep.subr.bf16.mxu0 %v1421
    %1755 = vmatpush1.bf16.msra.mxu0 %v1420
    %1756 = vmatprep.subr.bf16.mxu0 0
    %1757 = vmatpush2.bf16.msra.mxu0 0
    %1758 = vmatprep.subr.bf16.mxu0 0
    %1759 = vmatpush2.bf16.msra.mxu0 0
    %1760 = vmatprep.subr.bf16.mxu0 0
    %1761 = vmatpush2.bf16.msra.mxu0 0
    %1762 = vmatprep.subr.bf16.mxu0 0
    %1763 = vmatpush2.bf16.msra.mxu0 0
    %1764 = vmatprep.subr.bf16.mxu0 0
    %1765 = vmatpush2.bf16.msra.mxu0 0
    %1766 = vmatprep.subr.bf16.mxu0 0
    %1767 = vmatpush2.bf16.msra.mxu0 0
    %1768 = vmatprep.subr.bf16.mxu0 0
    %1769 = vmatpush2.bf16.msra.mxu0 0
    %1770 = vmatprep.subr.bf16.mxu0 0
    %1771 = vmatpush2.bf16.msra.mxu0 0
    %1772 = vmatprep.mubr.bf16.mxu0 0
    %1773 = vmatmul.mubr.bf16.gmra.mxu0 %v1697
    %v1774 = vpop.f32.mrf.mxu0
    %v1775 = vadd.f32 0.0, %v1774
    %v1776 = vpop.f32.mrf.mxu0
    %v1777 = vadd.f32 0.0, %v1776
    %v1778 = vpop.f32.mrf.mxu0
    %v1779 = vpop.f32.mrf.mxu0
    %1780 = vdwg.mxu0
    %v1785 = vrot.slane %v1734, 2
    %v1786 = vrot.slane %v1736, 2
    %v1787 = vrot.slane %v1775, 2
    %v1788 = vrot.slane %v1777, 2
    %v1793 = vadd.f32 %v1318, %v1785
    %v1794 = vadd.f32 %v1320, %v1786
    %v1795 = vadd.f32 %v1361, %v1787
    %v1796 = vadd.f32 %v1363, %v1788
    %v1797 = vxor.u32 %v1793, 2147483648
    %v1798 = vxor.u32 %v1794, 2147483648
    %v1799 = vxor.u32 %v1795, 2147483648
    %v1800 = vmul.f32 %v1797, 1.442695
    %v1801 = vpow.pop %v1800
    %v1802 = vmul.f32 %v1798, 1.442695
    %v1803 = vpow.pop %v1802
    %v1804 = vmul.f32 %v1799, 1.442695
    %v1805 = vpow.pop %v1804
    %v1806 = vadd.f32 %v1801, 1.0
    %v1807 = vadd.f32 %v1803, 1.0
    %v1808 = vadd.f32 %v1805, 1.0
    %v1809 = vrcp.pop %v1806
    %v1810 = vmul.f32 1.0, %v1809
    %v1811 = vrcp.pop %v1807
    %v1812 = vmul.f32 1.0, %v1811
    %v1813 = vrcp.pop %v1808
    %v1814 = vmul.f32 1.0, %v1813
    %v1815 = vtanh.pop %v1796
    %v1817 = vrot.slane %v1690, 6
    %v1819 = vmul.f32 %v1812, %v1817
    %v1820 = vmul.f32 %v1810, %v1815
    %v1821 = vadd.f32 %v1819, %v1820
    %v1822 = vtanh.pop %v1821
    %v1823 = vmul.f32 %v1814, %v1822
    %v1824 = vpack.c.bf16 %v1823, %v1823
    %v1826 = vrot.slane %v1824, 3
    %v1828 = vsel %vm292, %v1826, 0
    %1830 = vmatprep.subr.bf16.mxu0 0
    %1831 = vmatpush1.bf16.msra.mxu0 0
    %1832 = vmatprep.subr.bf16.mxu0 0
    %1833 = vmatpush1.bf16.msra.mxu0 0
    %1834 = vmatprep.subr.bf16.mxu0 0
    %1835 = vmatpush1.bf16.msra.mxu0 0
    %1836 = vmatprep.subr.bf16.mxu0 0
    %1837 = vmatpush1.bf16.msra.mxu0 0
    %1838 = vmatprep.subr.bf16.mxu0 0
    %1839 = vmatpush1.bf16.msra.mxu0 0
    %1840 = vmatprep.subr.bf16.mxu0 0
    %1841 = vmatpush1.bf16.msra.mxu0 0
    %1842 = vmatprep.subr.bf16.mxu0 %v1423
    %1843 = vmatpush1.bf16.msra.mxu0 %v1422
    %1844 = vmatprep.subr.bf16.mxu0 %v1419
    %1845 = vmatpush1.bf16.msra.mxu0 %v1418
    %1846 = vmatprep.subr.bf16.mxu0 0
    %1847 = vmatpush2.bf16.msra.mxu0 0
    %1848 = vmatprep.subr.bf16.mxu0 0
    %1849 = vmatpush2.bf16.msra.mxu0 0
    %1850 = vmatprep.subr.bf16.mxu0 0
    %1851 = vmatpush2.bf16.msra.mxu0 0
    %1852 = vmatprep.subr.bf16.mxu0 0
    %1853 = vmatpush2.bf16.msra.mxu0 0
    %1854 = vmatprep.subr.bf16.mxu0 0
    %1855 = vmatpush2.bf16.msra.mxu0 0
    %1856 = vmatprep.subr.bf16.mxu0 0
    %1857 = vmatpush2.bf16.msra.mxu0 0
    %1858 = vmatprep.subr.bf16.mxu0 0
    %1859 = vmatpush2.bf16.msra.mxu0 0
    %1860 = vmatprep.subr.bf16.mxu0 0
    %1861 = vmatpush2.bf16.msra.mxu0 0
    %1862 = vmatprep.mubr.bf16.mxu0 0
    %1863 = vmatmul.mubr.bf16.gmra.mxu0 %v1828
    %v1864 = vpop.f32.mrf.mxu0
    %v1865 = vadd.f32 0.0, %v1864
    %v1866 = vpop.f32.mrf.mxu0
    %v1867 = vadd.f32 0.0, %v1866
    %v1868 = vpop.f32.mrf.mxu0
    %v1869 = vpop.f32.mrf.mxu0
    %1870 = vdwg.mxu0
    %1871 = vmatprep.subr.bf16.mxu0 0
    %1872 = vmatpush1.bf16.msra.mxu0 0
    %1873 = vmatprep.subr.bf16.mxu0 0
    %1874 = vmatpush1.bf16.msra.mxu0 0
    %1875 = vmatprep.subr.bf16.mxu0 0
    %1876 = vmatpush1.bf16.msra.mxu0 0
    %1877 = vmatprep.subr.bf16.mxu0 0
    %1878 = vmatpush1.bf16.msra.mxu0 0
    %1879 = vmatprep.subr.bf16.mxu0 0
    %1880 = vmatpush1.bf16.msra.mxu0 0
    %1881 = vmatprep.subr.bf16.mxu0 0
    %1882 = vmatpush1.bf16.msra.mxu0 0
    %1883 = vmatprep.subr.bf16.mxu0 %v1425
    %1884 = vmatpush1.bf16.msra.mxu0 %v1424
    %1885 = vmatprep.subr.bf16.mxu0 %v1421
    %1886 = vmatpush1.bf16.msra.mxu0 %v1420
    %1887 = vmatprep.subr.bf16.mxu0 0
    %1888 = vmatpush2.bf16.msra.mxu0 0
    %1889 = vmatprep.subr.bf16.mxu0 0
    %1890 = vmatpush2.bf16.msra.mxu0 0
    %1891 = vmatprep.subr.bf16.mxu0 0
    %1892 = vmatpush2.bf16.msra.mxu0 0
    %1893 = vmatprep.subr.bf16.mxu0 0
    %1894 = vmatpush2.bf16.msra.mxu0 0
    %1895 = vmatprep.subr.bf16.mxu0 0
    %1896 = vmatpush2.bf16.msra.mxu0 0
    %1897 = vmatprep.subr.bf16.mxu0 0
    %1898 = vmatpush2.bf16.msra.mxu0 0
    %1899 = vmatprep.subr.bf16.mxu0 0
    %1900 = vmatpush2.bf16.msra.mxu0 0
    %1901 = vmatprep.subr.bf16.mxu0 0
    %1902 = vmatpush2.bf16.msra.mxu0 0
    %1903 = vmatprep.mubr.bf16.mxu0 0
    %1904 = vmatmul.mubr.bf16.gmra.mxu0 %v1828
    %v1905 = vpop.f32.mrf.mxu0
    %v1906 = vadd.f32 0.0, %v1905
    %v1907 = vpop.f32.mrf.mxu0
    %v1908 = vadd.f32 0.0, %v1907
    %v1909 = vpop.f32.mrf.mxu0
    %v1910 = vpop.f32.mrf.mxu0
    %1911 = vdwg.mxu0
    %v1912 = vadd.f32 %v1322, %v1865
    %v1913 = vadd.f32 %v1324, %v1867
    %v1914 = vadd.f32 %v1365, %v1906
    %v1915 = vadd.f32 %v1367, %v1908
    %v1916 = vxor.u32 %v1912, 2147483648
    %v1917 = vxor.u32 %v1913, 2147483648
    %v1918 = vxor.u32 %v1914, 2147483648
    %v1919 = vmul.f32 %v1916, 1.442695
    %v1920 = vpow.pop %v1919
    %v1921 = vmul.f32 %v1917, 1.442695
    %v1922 = vpow.pop %v1921
    %v1923 = vmul.f32 %v1918, 1.442695
    %v1924 = vpow.pop %v1923
    %v1925 = vadd.f32 %v1920, 1.0
    %v1926 = vadd.f32 %v1922, 1.0
    %v1927 = vadd.f32 %v1924, 1.0
    %v1928 = vrcp.pop %v1925
    %v1929 = vmul.f32 1.0, %v1928
    %v1930 = vrcp.pop %v1926
    %v1931 = vmul.f32 1.0, %v1930
    %v1932 = vrcp.pop %v1927
    %v1933 = vmul.f32 1.0, %v1932
    %v1934 = vtanh.pop %v1915
    %v1936 = vrot.slane %v1821, 6
    %v1938 = vmul.f32 %v1931, %v1936
    %v1939 = vmul.f32 %v1929, %v1934
    %v1940 = vadd.f32 %v1938, %v1939
    %v1941 = vtanh.pop %v1940
    %v1942 = vmul.f32 %v1933, %v1941
    %v1943 = vpack.c.bf16 %v1942, %v1942
    %v1945 = vsel %vm292, %v1943, 0
    %1947 = vmatprep.subr.bf16.mxu0 0
    %1948 = vmatpush1.bf16.msra.mxu0 0
    %1949 = vmatprep.subr.bf16.mxu0 0
    %1950 = vmatpush1.bf16.msra.mxu0 0
    %1951 = vmatprep.subr.bf16.mxu0 0
    %1952 = vmatpush1.bf16.msra.mxu0 0
    %1953 = vmatprep.subr.bf16.mxu0 0
    %1954 = vmatpush1.bf16.msra.mxu0 0
    %1955 = vmatprep.subr.bf16.mxu0 0
    %1956 = vmatpush1.bf16.msra.mxu0 0
    %1957 = vmatprep.subr.bf16.mxu0 0
    %1958 = vmatpush1.bf16.msra.mxu0 0
    %1959 = vmatprep.subr.bf16.mxu0 %v1423
    %1960 = vmatpush1.bf16.msra.mxu0 %v1422
    %1961 = vmatprep.subr.bf16.mxu0 %v1419
    %1962 = vmatpush1.bf16.msra.mxu0 %v1418
    %1963 = vmatprep.subr.bf16.mxu0 0
    %1964 = vmatpush2.bf16.msra.mxu0 0
    %1965 = vmatprep.subr.bf16.mxu0 0
    %1966 = vmatpush2.bf16.msra.mxu0 0
    %1967 = vmatprep.subr.bf16.mxu0 0
    %1968 = vmatpush2.bf16.msra.mxu0 0
    %1969 = vmatprep.subr.bf16.mxu0 0
    %1970 = vmatpush2.bf16.msra.mxu0 0
    %1971 = vmatprep.subr.bf16.mxu0 0
    %1972 = vmatpush2.bf16.msra.mxu0 0
    %1973 = vmatprep.subr.bf16.mxu0 0
    %1974 = vmatpush2.bf16.msra.mxu0 0
    %1975 = vmatprep.subr.bf16.mxu0 0
    %1976 = vmatpush2.bf16.msra.mxu0 0
    %1977 = vmatprep.subr.bf16.mxu0 0
    %1978 = vmatpush2.bf16.msra.mxu0 0
    %1979 = vmatprep.mubr.bf16.mxu0 0
    %1980 = vmatmul.mubr.bf16.gmra.mxu0 %v1945
    %v1981 = vpop.f32.mrf.mxu0
    %v1982 = vadd.f32 0.0, %v1981
    %v1983 = vpop.f32.mrf.mxu0
    %v1984 = vadd.f32 0.0, %v1983
    %v1985 = vpop.f32.mrf.mxu0
    %v1986 = vpop.f32.mrf.mxu0
    %1987 = vdwg.mxu0
    %1988 = vmatprep.subr.bf16.mxu0 0
    %1989 = vmatpush1.bf16.msra.mxu0 0
    %1990 = vmatprep.subr.bf16.mxu0 0
    %1991 = vmatpush1.bf16.msra.mxu0 0
    %1992 = vmatprep.subr.bf16.mxu0 0
    %1993 = vmatpush1.bf16.msra.mxu0 0
    %1994 = vmatprep.subr.bf16.mxu0 0
    %1995 = vmatpush1.bf16.msra.mxu0 0
    %1996 = vmatprep.subr.bf16.mxu0 0
    %1997 = vmatpush1.bf16.msra.mxu0 0
    %1998 = vmatprep.subr.bf16.mxu0 0
    %1999 = vmatpush1.bf16.msra.mxu0 0
    %2000 = vmatprep.subr.bf16.mxu0 %v1425
    %2001 = vmatpush1.bf16.msra.mxu0 %v1424
    %2002 = vmatprep.subr.bf16.mxu0 %v1421
    %2003 = vmatpush1.bf16.msra.mxu0 %v1420
    %2004 = vmatprep.subr.bf16.mxu0 0
    %2005 = vmatpush2.bf16.msra.mxu0 0
    %2006 = vmatprep.subr.bf16.mxu0 0
    %2007 = vmatpush2.bf16.msra.mxu0 0
    %2008 = vmatprep.subr.bf16.mxu0 0
    %2009 = vmatpush2.bf16.msra.mxu0 0
    %2010 = vmatprep.subr.bf16.mxu0 0
    %2011 = vmatpush2.bf16.msra.mxu0 0
    %2012 = vmatprep.subr.bf16.mxu0 0
    %2013 = vmatpush2.bf16.msra.mxu0 0
    %2014 = vmatprep.subr.bf16.mxu0 0
    %2015 = vmatpush2.bf16.msra.mxu0 0
    %2016 = vmatprep.subr.bf16.mxu0 0
    %2017 = vmatpush2.bf16.msra.mxu0 0
    %2018 = vmatprep.subr.bf16.mxu0 0
    %2019 = vmatpush2.bf16.msra.mxu0 0
    %2020 = vmatprep.mubr.bf16.mxu0 0
    %2021 = vmatmul.mubr.bf16.gmra.mxu0 %v1945
    %v2022 = vpop.f32.mrf.mxu0
    %v2023 = vadd.f32 0.0, %v2022
    %v2024 = vpop.f32.mrf.mxu0
    %v2025 = vadd.f32 0.0, %v2024
    %v2026 = vpop.f32.mrf.mxu0
    %v2027 = vpop.f32.mrf.mxu0
    %2028 = vdwg.mxu0
    %v2033 = vrot.slane %v1982, 6
    %v2034 = vrot.slane %v1984, 6
    %v2035 = vrot.slane %v2023, 6
    %v2036 = vrot.slane %v2025, 6
    %v2041 = vadd.f32 %v1322, %v2033
    %v2042 = vadd.f32 %v1324, %v2034
    %v2043 = vadd.f32 %v1365, %v2035
    %v2044 = vadd.f32 %v1367, %v2036
    %v2045 = vxor.u32 %v2041, 2147483648
    %v2046 = vxor.u32 %v2042, 2147483648
    %v2047 = vxor.u32 %v2043, 2147483648
    %v2048 = vmul.f32 %v2045, 1.442695
    %v2049 = vpow.pop %v2048
    %v2050 = vmul.f32 %v2046, 1.442695
    %v2051 = vpow.pop %v2050
    %v2052 = vmul.f32 %v2047, 1.442695
    %v2053 = vpow.pop %v2052
    %v2054 = vadd.f32 %v2049, 1.0
    %v2055 = vadd.f32 %v2051, 1.0
    %v2056 = vadd.f32 %v2053, 1.0
    %v2057 = vrcp.pop %v2054
    %v2058 = vmul.f32 1.0, %v2057
    %v2059 = vrcp.pop %v2055
    %v2060 = vmul.f32 1.0, %v2059
    %v2061 = vrcp.pop %v2056
    %v2062 = vmul.f32 1.0, %v2061
    %v2063 = vtanh.pop %v2044
    %v2065 = vrot.slane %v1940, 6
    %v2067 = vmul.f32 %v2060, %v2065
    %v2068 = vmul.f32 %v2058, %v2063
    %v2069 = vadd.f32 %v2067, %v2068
    %v2070 = vtanh.pop %v2069
    %v2071 = vmul.f32 %v2062, %v2070
    %v2072 = vpack.c.bf16 %v2071, %v2071
    %v2074 = vrot.slane %v2072, 1
    %v2076 = vsel %vm292, %v2074, 0
    %2078 = vmatprep.subr.bf16.mxu0 0
    %2079 = vmatpush1.bf16.msra.mxu0 0
    %2080 = vmatprep.subr.bf16.mxu0 0
    %2081 = vmatpush1.bf16.msra.mxu0 0
    %2082 = vmatprep.subr.bf16.mxu0 0
    %2083 = vmatpush1.bf16.msra.mxu0 0
    %2084 = vmatprep.subr.bf16.mxu0 0
    %2085 = vmatpush1.bf16.msra.mxu0 0
    %2086 = vmatprep.subr.bf16.mxu0 0
    %2087 = vmatpush1.bf16.msra.mxu0 0
    %2088 = vmatprep.subr.bf16.mxu0 0
    %2089 = vmatpush1.bf16.msra.mxu0 0
    %2090 = vmatprep.subr.bf16.mxu0 %v1423
    %2091 = vmatpush1.bf16.msra.mxu0 %v1422
    %2092 = vmatprep.subr.bf16.mxu0 %v1419
    %2093 = vmatpush1.bf16.msra.mxu0 %v1418
    %2094 = vmatprep.subr.bf16.mxu0 0
    %2095 = vmatpush2.bf16.msra.mxu0 0
    %2096 = vmatprep.subr.bf16.mxu0 0
    %2097 = vmatpush2.bf16.msra.mxu0 0
    %2098 = vmatprep.subr.bf16.mxu0 0
    %2099 = vmatpush2.bf16.msra.mxu0 0
    %2100 = vmatprep.subr.bf16.mxu0 0
    %2101 = vmatpush2.bf16.msra.mxu0 0
    %2102 = vmatprep.subr.bf16.mxu0 0
    %2103 = vmatpush2.bf16.msra.mxu0 0
    %2104 = vmatprep.subr.bf16.mxu0 0
    %2105 = vmatpush2.bf16.msra.mxu0 0
    %2106 = vmatprep.subr.bf16.mxu0 0
    %2107 = vmatpush2.bf16.msra.mxu0 0
    %2108 = vmatprep.subr.bf16.mxu0 0
    %2109 = vmatpush2.bf16.msra.mxu0 0
    %2110 = vmatprep.mubr.bf16.mxu0 0
    %2111 = vmatmul.mubr.bf16.gmra.mxu0 %v2076
    %v2112 = vpop.f32.mrf.mxu0
    %v2113 = vadd.f32 0.0, %v2112
    %v2114 = vpop.f32.mrf.mxu0
    %v2115 = vadd.f32 0.0, %v2114
    %v2116 = vpop.f32.mrf.mxu0
    %v2117 = vpop.f32.mrf.mxu0
    %2118 = vdwg.mxu0
    %2119 = vmatprep.subr.bf16.mxu0 0
    %2120 = vmatpush1.bf16.msra.mxu0 0
    %2121 = vmatprep.subr.bf16.mxu0 0
    %2122 = vmatpush1.bf16.msra.mxu0 0
    %2123 = vmatprep.subr.bf16.mxu0 0
    %2124 = vmatpush1.bf16.msra.mxu0 0
    %2125 = vmatprep.subr.bf16.mxu0 0
    %2126 = vmatpush1.bf16.msra.mxu0 0
    %2127 = vmatprep.subr.bf16.mxu0 0
    %2128 = vmatpush1.bf16.msra.mxu0 0
    %2129 = vmatprep.subr.bf16.mxu0 0
    %2130 = vmatpush1.bf16.msra.mxu0 0
    %2131 = vmatprep.subr.bf16.mxu0 %v1425
    %2132 = vmatpush1.bf16.msra.mxu0 %v1424
    %2133 = vmatprep.subr.bf16.mxu0 %v1421
    %2134 = vmatpush1.bf16.msra.mxu0 %v1420
    %2135 = vmatprep.subr.bf16.mxu0 0
    %2136 = vmatpush2.bf16.msra.mxu0 0
    %2137 = vmatprep.subr.bf16.mxu0 0
    %2138 = vmatpush2.bf16.msra.mxu0 0
    %2139 = vmatprep.subr.bf16.mxu0 0
    %2140 = vmatpush2.bf16.msra.mxu0 0
    %2141 = vmatprep.subr.bf16.mxu0 0
    %2142 = vmatpush2.bf16.msra.mxu0 0
    %2143 = vmatprep.subr.bf16.mxu0 0
    %2144 = vmatpush2.bf16.msra.mxu0 0
    %2145 = vmatprep.subr.bf16.mxu0 0
    %2146 = vmatpush2.bf16.msra.mxu0 0
    %2147 = vmatprep.subr.bf16.mxu0 0
    %2148 = vmatpush2.bf16.msra.mxu0 0
    %2149 = vmatprep.subr.bf16.mxu0 0
    %2150 = vmatpush2.bf16.msra.mxu0 0
    %2151 = vmatprep.mubr.bf16.mxu0 0
    %2152 = vmatmul.mubr.bf16.gmra.mxu0 %v2076
    %v2153 = vpop.f32.mrf.mxu0
    %v2154 = vadd.f32 0.0, %v2153
    %v2155 = vpop.f32.mrf.mxu0
    %v2156 = vadd.f32 0.0, %v2155
    %v2157 = vpop.f32.mrf.mxu0
    %v2158 = vpop.f32.mrf.mxu0
    %2159 = vdwg.mxu0
    %v2164 = vrot.slane %v2113, 4
    %v2165 = vrot.slane %v2115, 4
    %v2166 = vrot.slane %v2154, 4
    %v2167 = vrot.slane %v2156, 4
    %v2172 = vadd.f32 %v1322, %v2164
    %v2173 = vadd.f32 %v1324, %v2165
    %v2174 = vadd.f32 %v1365, %v2166
    %v2175 = vadd.f32 %v1367, %v2167
    %v2176 = vxor.u32 %v2172, 2147483648
    %v2177 = vxor.u32 %v2173, 2147483648
    %v2178 = vxor.u32 %v2174, 2147483648
    %v2179 = vmul.f32 %v2176, 1.442695
    %v2180 = vpow.pop %v2179
    %v2181 = vmul.f32 %v2177, 1.442695
    %v2182 = vpow.pop %v2181
    %v2183 = vmul.f32 %v2178, 1.442695
    %v2184 = vpow.pop %v2183
    %v2185 = vadd.f32 %v2180, 1.0
    %v2186 = vadd.f32 %v2182, 1.0
    %v2187 = vadd.f32 %v2184, 1.0
    %v2188 = vrcp.pop %v2185
    %v2189 = vmul.f32 1.0, %v2188
    %v2190 = vrcp.pop %v2186
    %v2191 = vmul.f32 1.0, %v2190
    %v2192 = vrcp.pop %v2187
    %v2193 = vmul.f32 1.0, %v2192
    %v2194 = vtanh.pop %v2175
    %v2196 = vrot.slane %v2069, 6
    %v2198 = vmul.f32 %v2191, %v2196
    %v2199 = vmul.f32 %v2189, %v2194
    %v2200 = vadd.f32 %v2198, %v2199
    %v2201 = vtanh.pop %v2200
    %v2202 = vmul.f32 %v2193, %v2201
    %v2203 = vpack.c.bf16 %v2202, %v2202
    %v2205 = vrot.slane %v2203, 2
    %v2207 = vsel %vm292, %v2205, 0
    %2209 = vmatprep.subr.bf16.mxu0 0
    %2210 = vmatpush1.bf16.msra.mxu0 0
    %2211 = vmatprep.subr.bf16.mxu0 0
    %2212 = vmatpush1.bf16.msra.mxu0 0
    %2213 = vmatprep.subr.bf16.mxu0 0
    %2214 = vmatpush1.bf16.msra.mxu0 0
    %2215 = vmatprep.subr.bf16.mxu0 0
    %2216 = vmatpush1.bf16.msra.mxu0 0
    %2217 = vmatprep.subr.bf16.mxu0 0
    %2218 = vmatpush1.bf16.msra.mxu0 0
    %2219 = vmatprep.subr.bf16.mxu0 0
    %2220 = vmatpush1.bf16.msra.mxu0 0
    %2221 = vmatprep.subr.bf16.mxu0 %v1423
    %2222 = vmatpush1.bf16.msra.mxu0 %v1422
    %2223 = vmatprep.subr.bf16.mxu0 %v1419
    %2224 = vmatpush1.bf16.msra.mxu0 %v1418
    %2225 = vmatprep.subr.bf16.mxu0 0
    %2226 = vmatpush2.bf16.msra.mxu0 0
    %2227 = vmatprep.subr.bf16.mxu0 0
    %2228 = vmatpush2.bf16.msra.mxu0 0
    %2229 = vmatprep.subr.bf16.mxu0 0
    %2230 = vmatpush2.bf16.msra.mxu0 0
    %2231 = vmatprep.subr.bf16.mxu0 0
    %2232 = vmatpush2.bf16.msra.mxu0 0
    %2233 = vmatprep.subr.bf16.mxu0 0
    %2234 = vmatpush2.bf16.msra.mxu0 0
    %2235 = vmatprep.subr.bf16.mxu0 0
    %2236 = vmatpush2.bf16.msra.mxu0 0
    %2237 = vmatprep.subr.bf16.mxu0 0
    %2238 = vmatpush2.bf16.msra.mxu0 0
    %2239 = vmatprep.subr.bf16.mxu0 0
    %2240 = vmatpush2.bf16.msra.mxu0 0
    %2241 = vmatprep.mubr.bf16.mxu0 0
    %2242 = vmatmul.mubr.bf16.gmra.mxu0 %v2207
    %v2243 = vpop.f32.mrf.mxu0
    %v2244 = vadd.f32 0.0, %v2243
    %v2245 = vpop.f32.mrf.mxu0
    %v2246 = vadd.f32 0.0, %v2245
    %v2247 = vpop.f32.mrf.mxu0
    %v2248 = vpop.f32.mrf.mxu0
    %2249 = vdwg.mxu0
    %2250 = vmatprep.subr.bf16.mxu0 0
    %2251 = vmatpush1.bf16.msra.mxu0 0
    %2252 = vmatprep.subr.bf16.mxu0 0
    %2253 = vmatpush1.bf16.msra.mxu0 0
    %2254 = vmatprep.subr.bf16.mxu0 0
    %2255 = vmatpush1.bf16.msra.mxu0 0
    %2256 = vmatprep.subr.bf16.mxu0 0
    %2257 = vmatpush1.bf16.msra.mxu0 0
    %2258 = vmatprep.subr.bf16.mxu0 0
    %2259 = vmatpush1.bf16.msra.mxu0 0
    %2260 = vmatprep.subr.bf16.mxu0 0
    %2261 = vmatpush1.bf16.msra.mxu0 0
    %2262 = vmatprep.subr.bf16.mxu0 %v1425
    %2263 = vmatpush1.bf16.msra.mxu0 %v1424
    %2264 = vmatprep.subr.bf16.mxu0 %v1421
    %2265 = vmatpush1.bf16.msra.mxu0 %v1420
    %2266 = vmatprep.subr.bf16.mxu0 0
    %2267 = vmatpush2.bf16.msra.mxu0 0
    %2268 = vmatprep.subr.bf16.mxu0 0
    %2269 = vmatpush2.bf16.msra.mxu0 0
    %2270 = vmatprep.subr.bf16.mxu0 0
    %2271 = vmatpush2.bf16.msra.mxu0 0
    %2272 = vmatprep.subr.bf16.mxu0 0
    %2273 = vmatpush2.bf16.msra.mxu0 0
    %2274 = vmatprep.subr.bf16.mxu0 0
    %2275 = vmatpush2.bf16.msra.mxu0 0
    %2276 = vmatprep.subr.bf16.mxu0 0
    %2277 = vmatpush2.bf16.msra.mxu0 0
    %2278 = vmatprep.subr.bf16.mxu0 0
    %2279 = vmatpush2.bf16.msra.mxu0 0
    %2280 = vmatprep.subr.bf16.mxu0 0
    %2281 = vmatpush2.bf16.msra.mxu0 0
    %2282 = vmatprep.mubr.bf16.mxu0 0
    %2283 = vmatmul.mubr.bf16.gmra.mxu0 %v2207
    %v2284 = vpop.f32.mrf.mxu0
    %v2285 = vadd.f32 0.0, %v2284
    %v2286 = vpop.f32.mrf.mxu0
    %v2287 = vadd.f32 0.0, %v2286
    %v2288 = vpop.f32.mrf.mxu0
    %v2289 = vpop.f32.mrf.mxu0
    %2290 = vdwg.mxu0
    %v2295 = vrot.slane %v2244, 2
    %v2296 = vrot.slane %v2246, 2
    %v2297 = vrot.slane %v2285, 2
    %v2298 = vrot.slane %v2287, 2
    %v2303 = vadd.f32 %v1322, %v2295
    %v2304 = vadd.f32 %v1324, %v2296
    %v2305 = vadd.f32 %v1365, %v2297
    %v2306 = vadd.f32 %v1367, %v2298
    %v2307 = vxor.u32 %v2303, 2147483648
    %v2308 = vxor.u32 %v2304, 2147483648
    %v2309 = vxor.u32 %v2305, 2147483648
    %v2310 = vmul.f32 %v2307, 1.442695
    %v2311 = vpow.pop %v2310
    %v2312 = vmul.f32 %v2308, 1.442695
    %v2313 = vpow.pop %v2312
    %v2314 = vmul.f32 %v2309, 1.442695
    %v2315 = vpow.pop %v2314
    %v2316 = vadd.f32 %v2311, 1.0
    %v2317 = vadd.f32 %v2313, 1.0
    %v2318 = vadd.f32 %v2315, 1.0
    %v2319 = vrcp.pop %v2316
    %v2320 = vmul.f32 1.0, %v2319
    %v2321 = vrcp.pop %v2317
    %v2322 = vmul.f32 1.0, %v2321
    %v2323 = vrcp.pop %v2318
    %v2324 = vmul.f32 1.0, %v2323
    %v2325 = vtanh.pop %v2306
    %v2327 = vrot.slane %v2200, 6
    %v2329 = vmul.f32 %v2322, %v2327
    %v2330 = vmul.f32 %v2320, %v2325
    %v2331 = vadd.f32 %v2329, %v2330
    %v2332 = vtanh.pop %v2331
    %v2333 = vmul.f32 %v2324, %v2332
    %v2334 = vpack.c.bf16 %v2333, %v2333
    %v2335 = vld [vmem:[%s7] sm:$0xf]
    %v2336 = vld [vmem:[%s7 + $0x4] sm:$0xf]
    %v2337 = vld [vmem:[%s7 + $0x8] sm:$0xf]
    %v2338 = vld [vmem:[%s7 + $0xc] sm:$0xf]
    %v2340 = vrot.slane %v2334, 3
    %v2345 = vunpack.c.l.b16 %v2335
    %v2346 = vunpack.c.l.b16 %v2336
    %v2347 = vunpack.c.l.b16 %v2337
    %v2348 = vunpack.c.l.b16 %v2338
    %v2349 = vpack.c.b16 %v2346, %v2345
    %v2350 = vpack.c.b16 %v2348, %v2347
    %v2354 = vsel %vm292, %v2340, 0
    %2356 = vmatprep.subr.bf16.mxu0 0
    %2357 = vmatpush1.bf16.msra.mxu0 0
    %2358 = vmatprep.subr.bf16.mxu0 0
    %2359 = vmatpush1.bf16.msra.mxu0 0
    %2360 = vmatprep.subr.bf16.mxu0 0
    %2361 = vmatpush1.bf16.msra.mxu0 0
    %2362 = vmatprep.subr.bf16.mxu0 0
    %2363 = vmatpush1.bf16.msra.mxu0 0
    %2364 = vmatprep.subr.bf16.mxu0 0
    %2365 = vmatpush1.bf16.msra.mxu0 0
    %2366 = vmatprep.subr.bf16.mxu0 0
    %2367 = vmatpush1.bf16.msra.mxu0 0
    %2368 = vmatprep.subr.bf16.mxu0 0
    %2369 = vmatpush1.bf16.msra.mxu0 %v2350
    %2370 = vmatprep.subr.bf16.mxu0 0
    %2371 = vmatpush1.bf16.msra.mxu0 %v2349
    %2372 = vmatprep.subr.bf16.mxu0 0
    %2373 = vmatpush2.bf16.msra.mxu0 0
    %2374 = vmatprep.subr.bf16.mxu0 0
    %2375 = vmatpush2.bf16.msra.mxu0 0
    %2376 = vmatprep.subr.bf16.mxu0 0
    %2377 = vmatpush2.bf16.msra.mxu0 0
    %2378 = vmatprep.subr.bf16.mxu0 0
    %2379 = vmatpush2.bf16.msra.mxu0 0
    %2380 = vmatprep.subr.bf16.mxu0 0
    %2381 = vmatpush2.bf16.msra.mxu0 0
    %2382 = vmatprep.subr.bf16.mxu0 0
    %2383 = vmatpush2.bf16.msra.mxu0 0
    %2384 = vmatprep.subr.bf16.mxu0 0
    %2385 = vmatpush2.bf16.msra.mxu0 0
    %2386 = vmatprep.subr.bf16.mxu0 0
    %2387 = vmatpush2.bf16.msra.mxu0 0
    %2388 = vmatprep.mubr.bf16.mxu0 0
    %2389 = vmatmul.mubr.bf16.gmra.mxu0 %v2354
    %v2390 = vpop.f32.mrf.mxu0
    %v2391 = vadd.f32 0.0, %v2390
    %v2392 = vpop.f32.mrf.mxu0
    %v2393 = vpop.f32.mrf.mxu0
    %v2394 = vpop.f32.mrf.mxu0
    %2395 = vdwg.mxu0
    %vm2396 = vcmask 25600
    %2397 = vst.msk [vmem:[#allocation8] sm:$0x3] %vm2396, %v2391
    // Predicated region
    $region46: #{lstm_model_forward.1} parent=1 // pred_check
      _
    $region47: #{lstm_model_forward.1} parent=1 // pred_check_branch
      %2399 = sbr.rel (0) target = $region49
    $region48: #{lstm_model_forward.1} parent=1 // pred_region
      %s2401 = ssub.s32 32, 32
      %2402 = vsyncadd [#allocation4], %s2401
      %s2404 = sshll.u32 [#allocation8], 4
      %s2405 = int_to_ptr.vmem [resolvable:$true] %s2404
      %2407 = dma.vmem_to_hbm [thread:$0]  %s2405, 32, %s8, [#allocation4]
    $region49: #{lstm_model_forward.1} parent=1 // pred_fallthru
      _
    // Predicated region
    $region50: #{lstm_model_forward.1} parent=1 // pred_check
      _
    $region51: #{lstm_model_forward.1} parent=1 // pred_check_branch
      %2409 = sbr.rel (0) target = $region53
    $region52: #{lstm_model_forward.1} parent=1 // pred_region
      %2410 = dma.done [#allocation4], 32
    $region53: #{lstm_model_forward.1} parent=1 // pred_fallthru
      _
    %2411 = vsyncpa [#allocation3], 1
    %2412 = vsyncpa [#allocation6], 1
    %2413 = vsyncpa [#allocation4], 1

</llo_original>
